<compile_context>
chip_gen: v6e
topology: v6e:2x2x1
jax: 0.10.0
libtpu: 0.0.40
codegen_flags: <defaults>
</compile_context>

<pallas_src>
import math
import functools

import jax
import jax.numpy as jnp
from jax import lax
from jax.experimental import pallas as pl
from jax.experimental.pallas import tpu as pltpu


def _linformer_kernel(x_ref, wq_ref, bq_ref, wk_ref, bk_ref, wv_ref, bv_ref,
                      wpk_ref, wpv_ref, wo_ref, bo_ref,
                      o_ref,
                      kp_acc, vp_acc,
                      *, heads, dim_heads):
    ph = pl.program_id(1)   # 0: reduce K/V projections, 1: attention + output
    ti = pl.program_id(2)   # sequence-tile index

    xb = x_ref[0]           # (tn, dim) bf16

    # ---------------- Phase 0: accumulate k_proj / v_proj over seq tiles -----
    @pl.when(ph == 0)
    def _phase_kv():
        @pl.when(ti == 0)
        def _init():
            kp_acc[...] = jnp.zeros_like(kp_acc)
            vp_acc[...] = jnp.zeros_like(vp_acc)

        # Full-width (all heads) K/V projections for this sequence tile.
        k_t = jnp.dot(xb, wk_ref[...],
                      preferred_element_type=jnp.float32) + bk_ref[...]
        v_t = jnp.dot(xb, wv_ref[...],
                      preferred_element_type=jnp.float32) + bv_ref[...]

        # (tn, k_dim)^T @ (tn, dim) -> (k_dim, dim); transpose folded into the
        # dot_general contraction (no explicit XLU transpose, f32 accumulate).
        dn = (((0,), (0,)), ((), ()))
        kp_acc[...] += lax.dot_general(wpk_ref[...], k_t.astype(jnp.bfloat16),
                                       dn, preferred_element_type=jnp.float32)
        vp_acc[...] += lax.dot_general(wpv_ref[...], v_t.astype(jnp.bfloat16),
                                       dn, preferred_element_type=jnp.float32)

    # ---------------- Phase 1: attention + output proj for this query tile ---
    @pl.when(ph == 1)
    def _phase_attn():
        scale = 1.0 / math.sqrt(dim_heads)
        q = jnp.dot(xb, wq_ref[...],
                    preferred_element_type=jnp.float32) + bq_ref[...]
        q = (q * scale).astype(jnp.bfloat16)              # (tn, dim)

        kp = kp_acc[...].astype(jnp.bfloat16)             # (k_dim, dim)
        vp = vp_acc[...].astype(jnp.bfloat16)

        dn_nt = (((1,), (1,)), ((), ()))                  # contract head dim
        outs = []
        for h in range(heads):                            # static unroll
            lo = h * dim_heads
            hi = lo + dim_heads
            qh = q[:, lo:hi]                              # (tn, d)
            kh = kp[:, lo:hi]                             # (k_dim, d)
            vh = vp[:, lo:hi]                             # (k_dim, d)

            s = lax.dot_general(qh, kh, dn_nt,
                                preferred_element_type=jnp.float32)  # (tn, kd)
            s = s - jnp.max(s, axis=-1, keepdims=True)
            p = jnp.exp(s)
            probs = p * pl.reciprocal(jnp.sum(p, axis=-1, keepdims=True),
                                      approx=True)
            outs.append(jnp.dot(probs.astype(jnp.bfloat16), vh,
                                preferred_element_type=jnp.float32))  # (tn, d)

        attn = jnp.concatenate(outs, axis=-1).astype(jnp.bfloat16)    # (tn,dim)
        out = jnp.dot(attn, wo_ref[...], preferred_element_type=jnp.float32)
        o_ref[0] = (out + bo_ref[...]).astype(o_ref.dtype)


def _pick_seq_tile(n, cap=512):
    """Largest multiple-of-16 divisor of n not exceeding cap, else full n."""
    if n <= cap:
        return n
    t = cap - (cap % 16)
    while t >= 16:
        if n % t == 0:
            return t
        t -= 16
    return n


def linformer_attention(x, params, *, heads, tile_n=None):
    """x: (b, n, dim) float32. Returns (b, n, dim) float32."""
    b, n, dim = x.shape
    assert dim % heads == 0
    d = dim // heads
    k_dim = params["wpk"].shape[0]

    if tile_n is None:
        tile_n = _pick_seq_tile(n)
    assert n % tile_n == 0
    nt = n // tile_n

    # bf16 operands for the MXU (halves DMA bytes); biases stay f32.
    cdt = jnp.bfloat16
    xb = x.astype(cdt)
    wq = params["wq"].astype(cdt)          # (dim, dim)
    wk = params["wk"].astype(cdt)
    wv = params["wv"].astype(cdt)
    wo = params["wo"].astype(cdt)
    bq = params["bq"].reshape(1, dim).astype(jnp.float32)
    bk = params["bk"].reshape(1, dim).astype(jnp.float32)
    bv = params["bv"].reshape(1, dim).astype(jnp.float32)
    bo = params["bo"].reshape(1, dim).astype(jnp.float32)
    wpk_t = params["wpk"].T.astype(cdt)    # (n, k_dim)
    wpv_t = params["wpv"].T.astype(cdt)

    kernel = functools.partial(_linformer_kernel, heads=heads, dim_heads=d)

    # Explicit VMEM budget: double-buffered tiles + weights + scratch + margin.
    block_bytes = (
        2 * tile_n * dim * 2          # x tile (bf16, double buffered)
        + 2 * 2 * tile_n * k_dim * 2  # wpk_t / wpv_t tiles
        + 4 * dim * dim * 2           # wq/wk/wv/wo (constant block index)
        + 4 * dim * 4                 # biases (f32)
        + 2 * tile_n * dim * 4        # output tile (f32, double buffered)
        + 2 * k_dim * dim * 4         # f32 K/V projection accumulators
    )
    vmem_limit = int(min(max(3 * block_bytes, 32 * 1024 * 1024),
                         56 * 1024 * 1024))   # stay under v7x's 64 MiB physical

    grid = (b, 2, nt)
    return pl.pallas_call(
        kernel,
        out_shape=jax.ShapeDtypeStruct((b, n, dim), jnp.float32),
        grid_spec=pltpu.PrefetchScalarGridSpec(
            num_scalar_prefetch=0,
            grid=grid,
            in_specs=[
                pl.BlockSpec((1, tile_n, dim), lambda bi, ph, ti: (bi, ti, 0)),  # x
                pl.BlockSpec((dim, dim), lambda bi, ph, ti: (0, 0)),             # wq
                pl.BlockSpec((1, dim), lambda bi, ph, ti: (0, 0)),               # bq
                pl.BlockSpec((dim, dim), lambda bi, ph, ti: (0, 0)),             # wk
                pl.BlockSpec((1, dim), lambda bi, ph, ti: (0, 0)),               # bk
                pl.BlockSpec((dim, dim), lambda bi, ph, ti: (0, 0)),             # wv
                pl.BlockSpec((1, dim), lambda bi, ph, ti: (0, 0)),               # bv
                pl.BlockSpec((tile_n, k_dim), lambda bi, ph, ti: (ti, 0)),       # wpk^T
                pl.BlockSpec((tile_n, k_dim), lambda bi, ph, ti: (ti, 0)),       # wpv^T
                pl.BlockSpec((dim, dim), lambda bi, ph, ti: (0, 0)),             # wo
                pl.BlockSpec((1, dim), lambda bi, ph, ti: (0, 0)),               # bo
            ],
            # Constant block index through phase 0 (ti*ph == 0): the output
            # buffer is never written back before its phase-1 step fills it.
            out_specs=pl.BlockSpec((1, tile_n, dim),
                                   lambda bi, ph, ti: (bi, ti * ph, 0)),
            scratch_shapes=[
                pltpu.VMEM((k_dim, dim), jnp.float32),   # k_proj accumulator
                pltpu.VMEM((k_dim, dim), jnp.float32),   # v_proj accumulator
            ],
        ),
        compiler_params=pltpu.CompilerParams(
            dimension_semantics=("parallel", "arbitrary", "arbitrary"),
            vmem_limit_bytes=vmem_limit,
        ),
    )(xb, wq, bq, wk, bk, wv, bv, wpk_t, wpv_t, wo, bo)


def linformer_reference(x, params, *, heads):
    """Pure-JAX f32 reference mirroring the PyTorch forward (mask=None, eval)."""
    b, n, dim = x.shape
    d = dim // heads
    q = x @ params["wq"] + params["bq"]
    k = x @ params["wk"] + params["bk"]
    v = x @ params["wv"] + params["bv"]
    q = q.reshape(b, n, heads, d).transpose(0, 2, 1, 3)            # b h n d
    k = k.reshape(b, n, heads, d).transpose(0, 2, 1, 3)
    v = v.reshape(b, n, heads, d).transpose(0, 2, 1, 3)
    k = jnp.einsum("kn,bhnd->bhkd", params["wpk"], k)              # seq -> k_dim
    v = jnp.einsum("kn,bhnd->bhkd", params["wpv"], v)
    scale = math.sqrt(d)
    scores = jnp.einsum("bhqd,bhkd->bhqk", q, k) / scale
    probs = jax.nn.softmax(scores, axis=-1)
    out = jnp.einsum("bhqk,bhkd->bhqd", probs, v)
    out = out.transpose(0, 2, 1, 3).reshape(b, n, heads * d)
    return out @ params["wo"] + params["bo"]


def init_params(key, dim, heads, k_dim, seq_len):
    inner_dim = dim  # dim_heads * heads
    keys = jax.random.split(key, 9)
    s = 0.05
    return {
        "wq": s * jax.random.normal(keys[0], (dim, inner_dim), jnp.float32),
        "bq": s * jax.random.normal(keys[1], (inner_dim,), jnp.float32),
        "wk": s * jax.random.normal(keys[2], (dim, inner_dim), jnp.float32),
        "bk": s * jax.random.normal(keys[3], (inner_dim,), jnp.float32),
        "wv": s * jax.random.normal(keys[4], (dim, inner_dim), jnp.float32),
        "bv": s * jax.random.normal(keys[5], (inner_dim,), jnp.float32),
        "wpk": s * jax.random.normal(keys[6], (k_dim, seq_len), jnp.float32),
        "wpv": s * jax.random.normal(keys[7], (k_dim, seq_len), jnp.float32),
        "wo": s * jax.random.normal(keys[8], (inner_dim, dim), jnp.float32),
        "bo": jnp.linspace(-0.1, 0.1, dim, dtype=jnp.float32),
    }


if __name__ == "__main__":
    batch, seq_len, dim, heads, k_dim = 2, 64, 128, 4, 16

    key = jax.random.PRNGKey(0)
    kx, kp = jax.random.split(key)
    x = jax.random.normal(kx, (batch, seq_len, dim), jnp.float32)
    params = init_params(kp, dim, heads, k_dim, seq_len)

    out = linformer_attention(x, params, heads=heads, tile_n=32)
    out = jax.block_until_ready(out)

    ref = linformer_reference(x, params, heads=heads)
    assert out.shape == (batch, seq_len, dim)
    # Kernel uses bf16 matmul operands -> mixed-precision comparison tolerance.
    assert jnp.allclose(out, ref, atol=2e-2, rtol=2e-2), "mismatch vs reference"

    print("KERNEL_OK")
</pallas_src>

<mosaic_0001>
module attributes {stable_mosaic.version = 11 : i64} {
  func.func @_linformer_kernel(%arg0: i32, %arg1: i32, %arg2: i32, %arg3: memref<1x32x128xbf16, #tpu.memory_space<vmem>>, %arg4: memref<128x128xbf16, #tpu.memory_space<vmem>>, %arg5: memref<1x128xf32, #tpu.memory_space<vmem>>, %arg6: memref<128x128xbf16, #tpu.memory_space<vmem>>, %arg7: memref<1x128xf32, #tpu.memory_space<vmem>>, %arg8: memref<128x128xbf16, #tpu.memory_space<vmem>>, %arg9: memref<1x128xf32, #tpu.memory_space<vmem>>, %arg10: memref<32x16xbf16, #tpu.memory_space<vmem>>, %arg11: memref<32x16xbf16, #tpu.memory_space<vmem>>, %arg12: memref<128x128xbf16, #tpu.memory_space<vmem>>, %arg13: memref<1x128xf32, #tpu.memory_space<vmem>>, %arg14: memref<1x32x128xf32, #tpu.memory_space<vmem>>, %arg15: memref<16x128xf32, #tpu.memory_space<vmem>>, %arg16: memref<16x128xf32, #tpu.memory_space<vmem>>) attributes {dimension_semantics = [#tpu.dimension_semantics<parallel>, #tpu.dimension_semantics<arbitrary>, #tpu.dimension_semantics<arbitrary>], iteration_bounds = array<i64: 2, 2, 2>, scalar_prefetch = 0 : i64, scratch_operands = 2 : i64, tpu.core_type = #tpu.core_type<tc>, window_params = [{transform_indices = @transform_0, window_bounds = array<i64: 1, 32, 128>}, {pipeline_mode = #tpu.pipeline_mode<synchronous>, transform_indices = @transform_1, window_bounds = array<i64: 128, 128>}, {pipeline_mode = #tpu.pipeline_mode<synchronous>, transform_indices = @transform_2, window_bounds = array<i64: 1, 128>}, {pipeline_mode = #tpu.pipeline_mode<synchronous>, transform_indices = @transform_3, window_bounds = array<i64: 128, 128>}, {pipeline_mode = #tpu.pipeline_mode<synchronous>, transform_indices = @transform_4, window_bounds = array<i64: 1, 128>}, {pipeline_mode = #tpu.pipeline_mode<synchronous>, transform_indices = @transform_5, window_bounds = array<i64: 128, 128>}, {pipeline_mode = #tpu.pipeline_mode<synchronous>, transform_indices = @transform_6, window_bounds = array<i64: 1, 128>}, {transform_indices = @transform_7, window_bounds = array<i64: 32, 16>}, {transform_indices = @transform_8, window_bounds = array<i64: 32, 16>}, {pipeline_mode = #tpu.pipeline_mode<synchronous>, transform_indices = @transform_9, window_bounds = array<i64: 128, 128>}, {pipeline_mode = #tpu.pipeline_mode<synchronous>, transform_indices = @transform_10, window_bounds = array<i64: 1, 128>}, {transform_indices = @transform_11, window_bounds = array<i64: 1, 32, 128>}]} {
    %c0 = arith.constant 0 : index
    %c0_0 = arith.constant 0 : index
    %c0_1 = arith.constant 0 : index
    %0 = vector.load %arg3[%c0, %c0_0, %c0_1] : memref<1x32x128xbf16, #tpu.memory_space<vmem>>, vector<1x32x128xbf16>
    %1 = vector.shape_cast %0 : vector<1x32x128xbf16> to vector<32x128xbf16>
    %c0_i32 = arith.constant 0 : i32
    %2 = arith.cmpi eq, %arg1, %c0_i32 : i32
    %3 = arith.extui %2 : i1 to i32
    %c0_i32_2 = arith.constant 0 : i32
    %4 = arith.cmpi ne, %3, %c0_i32_2 : i32
    scf.if %4 {
      %c0_i32_4 = arith.constant 0 : i32
      %8 = arith.cmpi eq, %arg2, %c0_i32_4 : i32
      %9 = arith.extui %8 : i1 to i32
      %c0_i32_5 = arith.constant 0 : i32
      %10 = arith.cmpi ne, %9, %c0_i32_5 : i32
      scf.if %10 {
        %cst_29 = arith.constant 0.000000e+00 : f32
        %33 = vector.broadcast %cst_29 : f32 to vector<16x128xf32>
        %c0_30 = arith.constant 0 : index
        %c0_31 = arith.constant 0 : index
        %34 = vector.load %arg15[%c0_30, %c0_31] : memref<16x128xf32, #tpu.memory_space<vmem>>, vector<16x128xf32>
        tpu.vector_store %arg15[%c0_30, %c0_31], %33 {strides = array<i32>} : memref<16x128xf32, #tpu.memory_space<vmem>>, vector<16x128xf32>,
        %cst_32 = arith.constant 0.000000e+00 : f32
        %35 = vector.broadcast %cst_32 : f32 to vector<16x128xf32>
        %c0_33 = arith.constant 0 : index
        %c0_34 = arith.constant 0 : index
        %36 = vector.load %arg16[%c0_33, %c0_34] : memref<16x128xf32, #tpu.memory_space<vmem>>, vector<16x128xf32>
        tpu.vector_store %arg16[%c0_33, %c0_34], %35 {strides = array<i32>} : memref<16x128xf32, #tpu.memory_space<vmem>>, vector<16x128xf32>,
      } else {
      }
      %c0_6 = arith.constant 0 : index
      %c0_7 = arith.constant 0 : index
      %11 = vector.load %arg6[%c0_6, %c0_7] : memref<128x128xbf16, #tpu.memory_space<vmem>>, vector<128x128xbf16>
      %cst = arith.constant dense<0.000000e+00> : vector<32x128xf32>
      %12 = tpu.matmul %1, %11, %cst {dimension_numbers = #tpu.dot_dimension_numbers<[1], [0], [0], [1], [0, 0, 1, 1], [], []>} : vector<32x128xbf16>, vector<128x128xbf16>, vector<32x128xf32> -> vector<32x128xf32>
      %c0_8 = arith.constant 0 : index
      %c0_9 = arith.constant 0 : index
      %13 = vector.load %arg7[%c0_8, %c0_9] : memref<1x128xf32, #tpu.memory_space<vmem>>, vector<1x128xf32>
      %14 = vector.broadcast %13 : vector<1x128xf32> to vector<32x128xf32>
      %15 = arith.addf %12, %14 : vector<32x128xf32>
      %c0_10 = arith.constant 0 : index
      %c0_11 = arith.constant 0 : index
      %16 = vector.load %arg8[%c0_10, %c0_11] : memref<128x128xbf16, #tpu.memory_space<vmem>>, vector<128x128xbf16>
      %cst_12 = arith.constant dense<0.000000e+00> : vector<32x128xf32>
      %17 = tpu.matmul %1, %16, %cst_12 {dimension_numbers = #tpu.dot_dimension_numbers<[1], [0], [0], [1], [0, 0, 1, 1], [], []>} : vector<32x128xbf16>, vector<128x128xbf16>, vector<32x128xf32> -> vector<32x128xf32>
      %c0_13 = arith.constant 0 : index
      %c0_14 = arith.constant 0 : index
      %18 = vector.load %arg9[%c0_13, %c0_14] : memref<1x128xf32, #tpu.memory_space<vmem>>, vector<1x128xf32>
      %19 = vector.broadcast %18 : vector<1x128xf32> to vector<32x128xf32>
      %20 = arith.addf %17, %19 : vector<32x128xf32>
      %c0_15 = arith.constant 0 : index
      %c0_16 = arith.constant 0 : index
      %21 = vector.load %arg15[%c0_15, %c0_16] : memref<16x128xf32, #tpu.memory_space<vmem>>, vector<16x128xf32>
      %c0_17 = arith.constant 0 : index
      %c0_18 = arith.constant 0 : index
      %22 = vector.load %arg10[%c0_17, %c0_18] : memref<32x16xbf16, #tpu.memory_space<vmem>>, vector<32x16xbf16>
      %23 = arith.truncf %15 : vector<32x128xf32> to vector<32x128xbf16>
      %cst_19 = arith.constant dense<0.000000e+00> : vector<16x128xf32>
      %24 = tpu.matmul %22, %23, %cst_19 {dimension_numbers = #tpu.dot_dimension_numbers<[0], [0], [1], [1], [0, 1, 1, 1], [], []>} : vector<32x16xbf16>, vector<32x128xbf16>, vector<16x128xf32> -> vector<16x128xf32>
      %25 = arith.addf %21, %24 : vector<16x128xf32>
      %c0_20 = arith.constant 0 : index
      %c0_21 = arith.constant 0 : index
      %26 = vector.load %arg15[%c0_20, %c0_21] : memref<16x128xf32, #tpu.memory_space<vmem>>, vector<16x128xf32>
      tpu.vector_store %arg15[%c0_20, %c0_21], %25 {strides = array<i32>} : memref<16x128xf32, #tpu.memory_space<vmem>>, vector<16x128xf32>,
      %c0_22 = arith.constant 0 : index
      %c0_23 = arith.constant 0 : index
      %27 = vector.load %arg16[%c0_22, %c0_23] : memref<16x128xf32, #tpu.memory_space<vmem>>, vector<16x128xf32>
      %c0_24 = arith.constant 0 : index
      %c0_25 = arith.constant 0 : index
      %28 = vector.load %arg11[%c0_24, %c0_25] : memref<32x16xbf16, #tpu.memory_space<vmem>>, vector<32x16xbf16>
      %29 = arith.truncf %20 : vector<32x128xf32> to vector<32x128xbf16>
      %cst_26 = arith.constant dense<0.000000e+00> : vector<16x128xf32>
      %30 = tpu.matmul %28, %29, %cst_26 {dimension_numbers = #tpu.dot_dimension_numbers<[0], [0], [1], [1], [0, 1, 1, 1], [], []>} : vector<32x16xbf16>, vector<32x128xbf16>, vector<16x128xf32> -> vector<16x128xf32>
      %31 = arith.addf %27, %30 : vector<16x128xf32>
      %c0_27 = arith.constant 0 : index
      %c0_28 = arith.constant 0 : index
      %32 = vector.load %arg16[%c0_27, %c0_28] : memref<16x128xf32, #tpu.memory_space<vmem>>, vector<16x128xf32>
      tpu.vector_store %arg16[%c0_27, %c0_28], %31 {strides = array<i32>} : memref<16x128xf32, #tpu.memory_space<vmem>>, vector<16x128xf32>,
    } else {
    }
    %c1_i32 = arith.constant 1 : i32
    %5 = arith.cmpi eq, %arg1, %c1_i32 : i32
    %6 = arith.extui %5 : i1 to i32
    %c0_i32_3 = arith.constant 0 : i32
    %7 = arith.cmpi ne, %6, %c0_i32_3 : i32
    scf.if %7 {
      %c0_4 = arith.constant 0 : index
      %c0_5 = arith.constant 0 : index
      %8 = vector.load %arg4[%c0_4, %c0_5] : memref<128x128xbf16, #tpu.memory_space<vmem>>, vector<128x128xbf16>
      %cst = arith.constant dense<0.000000e+00> : vector<32x128xf32>
      %9 = tpu.matmul %1, %8, %cst {dimension_numbers = #tpu.dot_dimension_numbers<[1], [0], [0], [1], [0, 0, 1, 1], [], []>} : vector<32x128xbf16>, vector<128x128xbf16>, vector<32x128xf32> -> vector<32x128xf32>
      %c0_6 = arith.constant 0 : index
      %c0_7 = arith.constant 0 : index
      %10 = vector.load %arg5[%c0_6, %c0_7] : memref<1x128xf32, #tpu.memory_space<vmem>>, vector<1x128xf32>
      %11 = vector.broadcast %10 : vector<1x128xf32> to vector<32x128xf32>
      %12 = arith.addf %9, %11 : vector<32x128xf32>
      %cst_8 = arith.constant 0.176776692 : f32
      %13 = vector.broadcast %cst_8 : f32 to vector<32x128xf32>
      %14 = arith.mulf %12, %13 : vector<32x128xf32>
      %15 = arith.truncf %14 : vector<32x128xf32> to vector<32x128xbf16>
      %c0_9 = arith.constant 0 : index
      %c0_10 = arith.constant 0 : index
      %16 = vector.load %arg15[%c0_9, %c0_10] : memref<16x128xf32, #tpu.memory_space<vmem>>, vector<16x128xf32>
      %17 = arith.truncf %16 : vector<16x128xf32> to vector<16x128xbf16>
      %c0_11 = arith.constant 0 : index
      %c0_12 = arith.constant 0 : index
      %18 = vector.load %arg16[%c0_11, %c0_12] : memref<16x128xf32, #tpu.memory_space<vmem>>, vector<16x128xf32>
      %19 = arith.truncf %18 : vector<16x128xf32> to vector<16x128xbf16>
      %20 = vector.extract_strided_slice %15 {offsets = [0, 0], sizes = [32, 32], strides = [1, 1]} : vector<32x128xbf16> to vector<32x32xbf16>
      %21 = vector.extract_strided_slice %17 {offsets = [0, 0], sizes = [16, 32], strides = [1, 1]} : vector<16x128xbf16> to vector<16x32xbf16>
      %22 = vector.extract_strided_slice %19 {offsets = [0, 0], sizes = [16, 32], strides = [1, 1]} : vector<16x128xbf16> to vector<16x32xbf16>
      %cst_13 = arith.constant dense<0.000000e+00> : vector<32x16xf32>
      %23 = tpu.matmul %20, %21, %cst_13 {dimension_numbers = #tpu.dot_dimension_numbers<[1], [1], [0], [0], [0, 0, 1, 0], [], []>} : vector<32x32xbf16>, vector<16x32xbf16>, vector<32x16xf32> -> vector<32x16xf32>
      %cst_14 = arith.constant dense<0xFF800000> : vector<32xf32>
      %24 = vector.multi_reduction <maximumf>, %23, %cst_14 [1] : vector<32x16xf32> to vector<32xf32>
      %25 = vector.shape_cast %24 : vector<32xf32> to vector<32x1xf32>
      %26 = vector.broadcast %25 : vector<32x1xf32> to vector<32x16xf32>
      %27 = arith.subf %23, %26 : vector<32x16xf32>
      %28 = math.exp %27 : vector<32x16xf32>
      %cst_15 = arith.constant dense<0.000000e+00> : vector<32xf32>
      %29 = vector.multi_reduction <add>, %28, %cst_15 [1] : vector<32x16xf32> to vector<32xf32>
      %30 = vector.shape_cast %29 : vector<32xf32> to vector<32x1xf32>
      %31 = tpu.reciprocal %30 {approx = true} : vector<32x1xf32> -> vector<32x1xf32>
      %32 = vector.broadcast %31 : vector<32x1xf32> to vector<32x16xf32>
      %33 = arith.mulf %28, %32 : vector<32x16xf32>
      %34 = arith.truncf %33 : vector<32x16xf32> to vector<32x16xbf16>
      %cst_16 = arith.constant dense<0.000000e+00> : vector<32x32xf32>
      %35 = tpu.matmul %34, %22, %cst_16 {dimension_numbers = #tpu.dot_dimension_numbers<[1], [0], [0], [1], [0, 0, 1, 1], [], []>} : vector<32x16xbf16>, vector<16x32xbf16>, vector<32x32xf32> -> vector<32x32xf32>
      %36 = vector.extract_strided_slice %15 {offsets = [0, 32], sizes = [32, 32], strides = [1, 1]} : vector<32x128xbf16> to vector<32x32xbf16>
      %37 = vector.extract_strided_slice %17 {offsets = [0, 32], sizes = [16, 32], strides = [1, 1]} : vector<16x128xbf16> to vector<16x32xbf16>
      %38 = vector.extract_strided_slice %19 {offsets = [0, 32], sizes = [16, 32], strides = [1, 1]} : vector<16x128xbf16> to vector<16x32xbf16>
      %cst_17 = arith.constant dense<0.000000e+00> : vector<32x16xf32>
      %39 = tpu.matmul %36, %37, %cst_17 {dimension_numbers = #tpu.dot_dimension_numbers<[1], [1], [0], [0], [0, 0, 1, 0], [], []>} : vector<32x32xbf16>, vector<16x32xbf16>, vector<32x16xf32> -> vector<32x16xf32>
      %cst_18 = arith.constant dense<0xFF800000> : vector<32xf32>
      %40 = vector.multi_reduction <maximumf>, %39, %cst_18 [1] : vector<32x16xf32> to vector<32xf32>
      %41 = vector.shape_cast %40 : vector<32xf32> to vector<32x1xf32>
      %42 = vector.broadcast %41 : vector<32x1xf32> to vector<32x16xf32>
      %43 = arith.subf %39, %42 : vector<32x16xf32>
      %44 = math.exp %43 : vector<32x16xf32>
      %cst_19 = arith.constant dense<0.000000e+00> : vector<32xf32>
      %45 = vector.multi_reduction <add>, %44, %cst_19 [1] : vector<32x16xf32> to vector<32xf32>
      %46 = vector.shape_cast %45 : vector<32xf32> to vector<32x1xf32>
      %47 = tpu.reciprocal %46 {approx = true} : vector<32x1xf32> -> vector<32x1xf32>
      %48 = vector.broadcast %47 : vector<32x1xf32> to vector<32x16xf32>
      %49 = arith.mulf %44, %48 : vector<32x16xf32>
      %50 = arith.truncf %49 : vector<32x16xf32> to vector<32x16xbf16>
      %cst_20 = arith.constant dense<0.000000e+00> : vector<32x32xf32>
      %51 = tpu.matmul %50, %38, %cst_20 {dimension_numbers = #tpu.dot_dimension_numbers<[1], [0], [0], [1], [0, 0, 1, 1], [], []>} : vector<32x16xbf16>, vector<16x32xbf16>, vector<32x32xf32> -> vector<32x32xf32>
      %52 = vector.extract_strided_slice %15 {offsets = [0, 64], sizes = [32, 32], strides = [1, 1]} : vector<32x128xbf16> to vector<32x32xbf16>
      %53 = vector.extract_strided_slice %17 {offsets = [0, 64], sizes = [16, 32], strides = [1, 1]} : vector<16x128xbf16> to vector<16x32xbf16>
      %54 = vector.extract_strided_slice %19 {offsets = [0, 64], sizes = [16, 32], strides = [1, 1]} : vector<16x128xbf16> to vector<16x32xbf16>
      %cst_21 = arith.constant dense<0.000000e+00> : vector<32x16xf32>
      %55 = tpu.matmul %52, %53, %cst_21 {dimension_numbers = #tpu.dot_dimension_numbers<[1], [1], [0], [0], [0, 0, 1, 0], [], []>} : vector<32x32xbf16>, vector<16x32xbf16>, vector<32x16xf32> -> vector<32x16xf32>
      %cst_22 = arith.constant dense<0xFF800000> : vector<32xf32>
      %56 = vector.multi_reduction <maximumf>, %55, %cst_22 [1] : vector<32x16xf32> to vector<32xf32>
      %57 = vector.shape_cast %56 : vector<32xf32> to vector<32x1xf32>
      %58 = vector.broadcast %57 : vector<32x1xf32> to vector<32x16xf32>
      %59 = arith.subf %55, %58 : vector<32x16xf32>
      %60 = math.exp %59 : vector<32x16xf32>
      %cst_23 = arith.constant dense<0.000000e+00> : vector<32xf32>
      %61 = vector.multi_reduction <add>, %60, %cst_23 [1] : vector<32x16xf32> to vector<32xf32>
      %62 = vector.shape_cast %61 : vector<32xf32> to vector<32x1xf32>
      %63 = tpu.reciprocal %62 {approx = true} : vector<32x1xf32> -> vector<32x1xf32>
      %64 = vector.broadcast %63 : vector<32x1xf32> to vector<32x16xf32>
      %65 = arith.mulf %60, %64 : vector<32x16xf32>
      %66 = arith.truncf %65 : vector<32x16xf32> to vector<32x16xbf16>
      %cst_24 = arith.constant dense<0.000000e+00> : vector<32x32xf32>
      %67 = tpu.matmul %66, %54, %cst_24 {dimension_numbers = #tpu.dot_dimension_numbers<[1], [0], [0], [1], [0, 0, 1, 1], [], []>} : vector<32x16xbf16>, vector<16x32xbf16>, vector<32x32xf32> -> vector<32x32xf32>
      %68 = vector.extract_strided_slice %15 {offsets = [0, 96], sizes = [32, 32], strides = [1, 1]} : vector<32x128xbf16> to vector<32x32xbf16>
      %69 = vector.extract_strided_slice %17 {offsets = [0, 96], sizes = [16, 32], strides = [1, 1]} : vector<16x128xbf16> to vector<16x32xbf16>
      %70 = vector.extract_strided_slice %19 {offsets = [0, 96], sizes = [16, 32], strides = [1, 1]} : vector<16x128xbf16> to vector<16x32xbf16>
      %cst_25 = arith.constant dense<0.000000e+00> : vector<32x16xf32>
      %71 = tpu.matmul %68, %69, %cst_25 {dimension_numbers = #tpu.dot_dimension_numbers<[1], [1], [0], [0], [0, 0, 1, 0], [], []>} : vector<32x32xbf16>, vector<16x32xbf16>, vector<32x16xf32> -> vector<32x16xf32>
      %cst_26 = arith.constant dense<0xFF800000> : vector<32xf32>
      %72 = vector.multi_reduction <maximumf>, %71, %cst_26 [1] : vector<32x16xf32> to vector<32xf32>
      %73 = vector.shape_cast %72 : vector<32xf32> to vector<32x1xf32>
      %74 = vector.broadcast %73 : vector<32x1xf32> to vector<32x16xf32>
      %75 = arith.subf %71, %74 : vector<32x16xf32>
      %76 = math.exp %75 : vector<32x16xf32>
      %cst_27 = arith.constant dense<0.000000e+00> : vector<32xf32>
      %77 = vector.multi_reduction <add>, %76, %cst_27 [1] : vector<32x16xf32> to vector<32xf32>
      %78 = vector.shape_cast %77 : vector<32xf32> to vector<32x1xf32>
      %79 = tpu.reciprocal %78 {approx = true} : vector<32x1xf32> -> vector<32x1xf32>
      %80 = vector.broadcast %79 : vector<32x1xf32> to vector<32x16xf32>
      %81 = arith.mulf %76, %80 : vector<32x16xf32>
      %82 = arith.truncf %81 : vector<32x16xf32> to vector<32x16xbf16>
      %cst_28 = arith.constant dense<0.000000e+00> : vector<32x32xf32>
      %83 = tpu.matmul %82, %70, %cst_28 {dimension_numbers = #tpu.dot_dimension_numbers<[1], [0], [0], [1], [0, 0, 1, 1], [], []>} : vector<32x16xbf16>, vector<16x32xbf16>, vector<32x32xf32> -> vector<32x32xf32>
      %84 = tpu.concatenate %35, %51, %67, %83 in 1 : vector<32x32xf32>, vector<32x32xf32>, vector<32x32xf32>, vector<32x32xf32> -> vector<32x128xf32>
      %85 = arith.truncf %84 : vector<32x128xf32> to vector<32x128xbf16>
      %c0_29 = arith.constant 0 : index
      %c0_30 = arith.constant 0 : index
      %86 = vector.load %arg12[%c0_29, %c0_30] : memref<128x128xbf16, #tpu.memory_space<vmem>>, vector<128x128xbf16>
      %cst_31 = arith.constant dense<0.000000e+00> : vector<32x128xf32>
      %87 = tpu.matmul %85, %86, %cst_31 {dimension_numbers = #tpu.dot_dimension_numbers<[1], [0], [0], [1], [0, 0, 1, 1], [], []>} : vector<32x128xbf16>, vector<128x128xbf16>, vector<32x128xf32> -> vector<32x128xf32>
      %c0_32 = arith.constant 0 : index
      %c0_33 = arith.constant 0 : index
      %88 = vector.load %arg13[%c0_32, %c0_33] : memref<1x128xf32, #tpu.memory_space<vmem>>, vector<1x128xf32>
      %89 = vector.broadcast %88 : vector<1x128xf32> to vector<32x128xf32>
      %90 = arith.addf %87, %89 : vector<32x128xf32>
      %c0_34 = arith.constant 0 : index
      %c0_35 = arith.constant 0 : index
      %c0_36 = arith.constant 0 : index
      %91 = vector.load %arg14[%c0_34, %c0_35, %c0_36] : memref<1x32x128xf32, #tpu.memory_space<vmem>>, vector<1x32x128xf32>
      %92 = vector.shape_cast %91 : vector<1x32x128xf32> to vector<32x128xf32>
      %93 = vector.shape_cast %90 : vector<32x128xf32> to vector<1x32x128xf32>
      tpu.vector_store %arg14[%c0_34, %c0_35, %c0_36], %93 {strides = array<i32>} : memref<1x32x128xf32, #tpu.memory_space<vmem>>, vector<1x32x128xf32>,
    } else {
    }
    return
  }
  func.func @transform_0(%arg0: i32, %arg1: i32, %arg2: i32) -> (i32, i32, i32) {
    %c0_i32 = arith.constant 0 : i32
    %c0_i32_0 = arith.constant 0 : i32
    return %arg0, %arg2, %c0_i32 : i32, i32, i32
  }
  func.func @transform_1(%arg0: i32, %arg1: i32, %arg2: i32) -> (i32, i32) {
    %c0_i32 = arith.constant 0 : i32
    %c0_i32_0 = arith.constant 0 : i32
    %c0_i32_1 = arith.constant 0 : i32
    return %c0_i32, %c0_i32_0 : i32, i32
  }
  func.func @transform_2(%arg0: i32, %arg1: i32, %arg2: i32) -> (i32, i32) {
    %c0_i32 = arith.constant 0 : i32
    %c0_i32_0 = arith.constant 0 : i32
    %c0_i32_1 = arith.constant 0 : i32
    return %c0_i32, %c0_i32_0 : i32, i32
  }
  func.func @transform_3(%arg0: i32, %arg1: i32, %arg2: i32) -> (i32, i32) {
    %c0_i32 = arith.constant 0 : i32
    %c0_i32_0 = arith.constant 0 : i32
    %c0_i32_1 = arith.constant 0 : i32
    return %c0_i32, %c0_i32_0 : i32, i32
  }
  func.func @transform_4(%arg0: i32, %arg1: i32, %arg2: i32) -> (i32, i32) {
    %c0_i32 = arith.constant 0 : i32
    %c0_i32_0 = arith.constant 0 : i32
    %c0_i32_1 = arith.constant 0 : i32
    return %c0_i32, %c0_i32_0 : i32, i32
  }
  func.func @transform_5(%arg0: i32, %arg1: i32, %arg2: i32) -> (i32, i32) {
    %c0_i32 = arith.constant 0 : i32
    %c0_i32_0 = arith.constant 0 : i32
    %c0_i32_1 = arith.constant 0 : i32
    return %c0_i32, %c0_i32_0 : i32, i32
  }
  func.func @transform_6(%arg0: i32, %arg1: i32, %arg2: i32) -> (i32, i32) {
    %c0_i32 = arith.constant 0 : i32
    %c0_i32_0 = arith.constant 0 : i32
    %c0_i32_1 = arith.constant 0 : i32
    return %c0_i32, %c0_i32_0 : i32, i32
  }
  func.func @transform_7(%arg0: i32, %arg1: i32, %arg2: i32) -> (i32, i32) {
    %c0_i32 = arith.constant 0 : i32
    %c0_i32_0 = arith.constant 0 : i32
    return %arg2, %c0_i32 : i32, i32
  }
  func.func @transform_8(%arg0: i32, %arg1: i32, %arg2: i32) -> (i32, i32) {
    %c0_i32 = arith.constant 0 : i32
    %c0_i32_0 = arith.constant 0 : i32
    return %arg2, %c0_i32 : i32, i32
  }
  func.func @transform_9(%arg0: i32, %arg1: i32, %arg2: i32) -> (i32, i32) {
    %c0_i32 = arith.constant 0 : i32
    %c0_i32_0 = arith.constant 0 : i32
    %c0_i32_1 = arith.constant 0 : i32
    return %c0_i32, %c0_i32_0 : i32, i32
  }
  func.func @transform_10(%arg0: i32, %arg1: i32, %arg2: i32) -> (i32, i32) {
    %c0_i32 = arith.constant 0 : i32
    %c0_i32_0 = arith.constant 0 : i32
    %c0_i32_1 = arith.constant 0 : i32
    return %c0_i32, %c0_i32_0 : i32, i32
  }
  func.func @transform_11(%arg0: i32, %arg1: i32, %arg2: i32) -> (i32, i32, i32) {
    %0 = arith.muli %arg2, %arg1 : i32
    %c0_i32 = arith.constant 0 : i32
    %c0_i32_0 = arith.constant 0 : i32
    return %arg0, %0, %c0_i32 : i32, i32, i32
  }
}

</mosaic_0001>

<llo_original>
// kernel: tpu_custom_call.1
$region0: #{tpu_custom_call.1}
  #allocation0 [shape = 'u32[]', space=smem, size = 0x4, offset = 0x4, fixed_abs, tag = 'smem constant byte address 0x4 - core index']
  #allocation1 [shape = 'u32[144,128]{1,0:T(1,128)}', space=vmem, size = 0x12000, scoped, tag = 'internal scratch']
  #allocation2 [shape = 'f32[16,128]{1,0:T(8,128)}', space=vmem, size = 0x2000, scoped, tag = 'scratch operand']
  #allocation3 [shape = 'f32[16,128]{1,0:T(8,128)}', space=vmem, size = 0x2000, scoped, tag = 'scratch operand']
  %s0 = inlined_call_operand.vmem [shape: bf16[2,64,128], index: 0, kind: input, shape index: {}]
  %s1 = inlined_call_operand.hbm [shape: bf16[128,128], index: 1, kind: input, shape index: {}]
  %s2 = inlined_call_operand.vmem [shape: f32[1,128], index: 2, kind: input, shape index: {}]
  %s3 = inlined_call_operand.hbm [shape: bf16[128,128], index: 3, kind: input, shape index: {}]
  %s4 = inlined_call_operand.vmem [shape: f32[1,128], index: 4, kind: input, shape index: {}]
  %s5 = inlined_call_operand.hbm [shape: bf16[128,128], index: 5, kind: input, shape index: {}]
  %s6 = inlined_call_operand.vmem [shape: f32[1,128], index: 6, kind: input, shape index: {}]
  %s7 = inlined_call_operand.vmem [shape: bf16[64,16], index: 7, kind: input, shape index: {}]
  %s8 = inlined_call_operand.vmem [shape: bf16[64,16], index: 8, kind: input, shape index: {}]
  %s9 = inlined_call_operand.hbm [shape: bf16[128,128], index: 9, kind: input, shape index: {}]
  %s10 = inlined_call_operand.vmem [shape: f32[1,128], index: 10, kind: input, shape index: {}]
  %s11 = inlined_call_operand.hbm [shape: f32[2,64,128], index: 11, kind: output, shape index: {}]
  %s12 = sld [smem:[#allocation0]]
  $region105: #{tpu_custom_call.1} parent=0
    _
  %s14 = ssub.s32 1, %s12
  %s15 = scalar_select 0, %s14, %s12
  $region1: #{tpu_custom_call.1} parent=0
    #allocation4 [shape = 'u8[32768]{0}', space=vmem, size = 0x8000, scoped, tag = 'input window, operand 1, single buffered']
    #allocation5 [shape = 's32[2]{0}', space=sflag, size = 0x8, scoped, tag = 'scoped memory for tpu_custom_call.1']
    #allocation6 [shape = 's32[2]{0}', space=sflag, size = 0x8, scoped, tag = 'scoped memory for tpu_custom_call.1']
    #allocation7 [shape = 'u8[32768]{0}', space=vmem, size = 0x8000, scoped, tag = 'input window, operand 3, single buffered']
    #allocation8 [shape = 's32[1]{0}', space=sflag, size = 0x4, scoped, tag = 'scoped memory for tpu_custom_call.1']
    #allocation9 [shape = 'u8[32768]{0}', space=vmem, size = 0x8000, scoped, tag = 'input window, operand 5, single buffered']
    #allocation10 [shape = 'u8[32768]{0}', space=vmem, size = 0x8000, scoped, tag = 'input window, operand 9, single buffered']
    #allocation11 [shape = 's32[1]{0}', space=sflag, size = 0x4, scoped, tag = 'scoped memory for tpu_custom_call.1']
    #allocation12 [shape = 'u8[32768]{0}', space=vmem, size = 0x8000, scoped, tag = 'output window, operand 0']
    %16 = vsyncpa [#allocation5], 0
    %17 = vsyncpa [#allocation8], 0
    %18 = vsyncpa [#allocation11], 0
    %19 = vsyncpa [#allocation6], 0
    %s20 = scalar_lea.sflag [#allocation6], 1
    %21 = vsyncpa %s20, 0
    loop: start=0, step=1, limit=10
    $region2: #{tpu_custom_call.1} parent=1 // loop_pre_header
      _
    $region3: #{tpu_custom_call.1} parent=1 // loop_header
      %s23 = sphi 0, %s27
      %p24 = scmp.ge.s32.totalorder %s23, 10
      %s30 = sphi 0, %s49
      %s31 = sphi 0, %s45
      %s32 = sphi 0, %s41
      %s33 = sphi 0, %s30
      %s34 = sphi 0, %s31
      %s35 = sphi 0, %s32
      %s36 = sphi 0, %s33
      %s37 = sphi 0, %s34
      %s38 = sphi 0, %s35
      %s54 = sphi 0, %s56
      %s57 = sphi 0, %s54
      %s58 = sphi 0, %s57
      %s74 = sphi 0, %s58
      %s78 = sphi 0, %s78
      %s80 = sphi 0, %s78
      %s81 = sphi 0, %s80
      %s95 = sphi 0, %s81
      %s99 = sphi 0, %s99
      %s101 = sphi 0, %s99
      %s102 = sphi 0, %s101
      %s116 = sphi 0, %s102
      %s120 = sphi 0, %s120
      %s122 = sphi 0, %s120
      %s123 = sphi 0, %s122
      %s137 = sphi 0, %s123
      %s141 = sphi 0, %s141
      %s143 = sphi 0, %s141
      %s144 = sphi 0, %s143
      %s158 = sphi 0, %s144
      %s162 = sphi 0, %s162
      %s164 = sphi 0, %s162
      %s165 = sphi 0, %s164
      %s179 = sphi 0, %s165
      %s183 = sphi 0, %s183
      %s185 = sphi 0, %s183
      %s186 = sphi 0, %s185
      %s200 = sphi 0, %s186
      %s206 = sphi 0, %s208
      %s209 = sphi 0, %s206
      %s210 = sphi 0, %s209
      %s226 = sphi 0, %s210
      %s232 = sphi 0, %s234
      %s235 = sphi 0, %s232
      %s236 = sphi 0, %s235
      %s252 = sphi 0, %s236
      %s256 = sphi 0, %s256
      %s258 = sphi 0, %s256
      %s259 = sphi 0, %s258
      %s273 = sphi 0, %s259
      %s277 = sphi 0, %s277
      %s279 = sphi 0, %s277
      %s280 = sphi 0, %s279
      %s294 = sphi 0, %s280
      %s304 = sphi 0, %s306
      %s307 = sphi 0, %s304
      %s308 = sphi 0, %s307
      %s324 = sphi 0, %s308
    $region4: #{tpu_custom_call.1} parent=1 // loop_header_branch
      %26 = sbr.rel (%p24) target = $region8
    $region5: #{tpu_custom_call.1} parent=1 // loop_body
      %s28 = ssub.s32 %s23, 1
      %s29 = ssub.s32 %s23, 2
      %s39 = sadd.s32 1, %s32
      %p40 = scmp.ge.s32.totalorder %s39, 2
      %s41 = scalar_select %p40, 0, %s39
      %s42 = sadd.s32 1, %s31
      %s43 = scalar_select %p40, %s42, %s31
      %p44 = scmp.ge.s32.totalorder %s43, 2
      %s45 = scalar_select %p44, 0, %s43
      %s46 = sadd.s32 1, %s30
      %s47 = scalar_select %p44, %s46, %s30
      %p48 = scmp.ge.s32.totalorder %s47, 2
      %s49 = scalar_select %p48, 0, %s47
      %s50 = ssub.s32 %s30, %s49
      %s51 = ssub.s32 %s32, %s41
      %s52 = sor.u32 %s50, %s51
      %p53 = scmp.eq.s32.totalorder %s52, 0
      %s55 = sadd.s32 %s54, 1
      %s56 = scalar_select %p53, %s54, %s55
      %p59 = pneg %p53
      %p60 = scmp.eq.s32.totalorder %s23, 7
      %p61 = por %p59, %p60
      %p62 = scmp.ne.s32.totalorder %s54, %s57
      %p63 = scmp.eq.s32.totalorder %s23, 0
      %p64 = por %p62, %p63
      %p65 = scmp.ne.s32.totalorder %s54, %s57
      %p66 = scmp.eq.s32.totalorder %s28, 7
      %p67 = por %p65, %p66
      %p68 = scmp.ne.s32.totalorder %s57, %s58
      %p69 = scmp.eq.s32.totalorder %s28, 0
      %p70 = por %p68, %p69
      %p71 = scmp.ne.s32.totalorder %s57, %s58
      %p72 = scmp.eq.s32.totalorder %s29, 7
      %p73 = por %p71, %p72
      %p75 = scmp.ne.s32.totalorder %s58, %s74
      %p76 = scmp.eq.s32.totalorder %s29, 0
      %p77 = por %p75, %p76
      %s79 = sadd.s32 %s78, 1
      %p82 = scmp.eq.s32.totalorder %s23, 7
      %p83 = scmp.ne.s32.totalorder %s78, %s80
      %p84 = scmp.eq.s32.totalorder %s23, 0
      %p85 = por %p83, %p84
      %p86 = scmp.ne.s32.totalorder %s78, %s80
      %p87 = scmp.eq.s32.totalorder %s28, 7
      %p88 = por %p86, %p87
      %p89 = scmp.ne.s32.totalorder %s80, %s81
      %p90 = scmp.eq.s32.totalorder %s28, 0
      %p91 = por %p89, %p90
      %p92 = scmp.ne.s32.totalorder %s80, %s81
      %p93 = scmp.eq.s32.totalorder %s29, 7
      %p94 = por %p92, %p93
      %p96 = scmp.ne.s32.totalorder %s81, %s95
      %p97 = scmp.eq.s32.totalorder %s29, 0
      %p98 = por %p96, %p97
      %s100 = sadd.s32 %s99, 1
      %p103 = scmp.eq.s32.totalorder %s23, 7
      %p104 = scmp.ne.s32.totalorder %s99, %s101
      %p105 = scmp.eq.s32.totalorder %s23, 0
      %p106 = por %p104, %p105
      %p107 = scmp.ne.s32.totalorder %s99, %s101
      %p108 = scmp.eq.s32.totalorder %s28, 7
      %p109 = por %p107, %p108
      %p110 = scmp.ne.s32.totalorder %s101, %s102
      %p111 = scmp.eq.s32.totalorder %s28, 0
      %p112 = por %p110, %p111
      %p113 = scmp.ne.s32.totalorder %s101, %s102
      %p114 = scmp.eq.s32.totalorder %s29, 7
      %p115 = por %p113, %p114
      %p117 = scmp.ne.s32.totalorder %s102, %s116
      %p118 = scmp.eq.s32.totalorder %s29, 0
      %p119 = por %p117, %p118
      %s121 = sadd.s32 %s120, 1
      %p124 = scmp.eq.s32.totalorder %s23, 7
      %p125 = scmp.ne.s32.totalorder %s120, %s122
      %p126 = scmp.eq.s32.totalorder %s23, 0
      %p127 = por %p125, %p126
      %p128 = scmp.ne.s32.totalorder %s120, %s122
      %p129 = scmp.eq.s32.totalorder %s28, 7
      %p130 = por %p128, %p129
      %p131 = scmp.ne.s32.totalorder %s122, %s123
      %p132 = scmp.eq.s32.totalorder %s28, 0
      %p133 = por %p131, %p132
      %p134 = scmp.ne.s32.totalorder %s122, %s123
      %p135 = scmp.eq.s32.totalorder %s29, 7
      %p136 = por %p134, %p135
      %p138 = scmp.ne.s32.totalorder %s123, %s137
      %p139 = scmp.eq.s32.totalorder %s29, 0
      %p140 = por %p138, %p139
      %s142 = sadd.s32 %s141, 1
      %p145 = scmp.eq.s32.totalorder %s23, 7
      %p146 = scmp.ne.s32.totalorder %s141, %s143
      %p147 = scmp.eq.s32.totalorder %s23, 0
      %p148 = por %p146, %p147
      %p149 = scmp.ne.s32.totalorder %s141, %s143
      %p150 = scmp.eq.s32.totalorder %s28, 7
      %p151 = por %p149, %p150
      %p152 = scmp.ne.s32.totalorder %s143, %s144
      %p153 = scmp.eq.s32.totalorder %s28, 0
      %p154 = por %p152, %p153
      %p155 = scmp.ne.s32.totalorder %s143, %s144
      %p156 = scmp.eq.s32.totalorder %s29, 7
      %p157 = por %p155, %p156
      %p159 = scmp.ne.s32.totalorder %s144, %s158
      %p160 = scmp.eq.s32.totalorder %s29, 0
      %p161 = por %p159, %p160
      %s163 = sadd.s32 %s162, 1
      %p166 = scmp.eq.s32.totalorder %s23, 7
      %p167 = scmp.ne.s32.totalorder %s162, %s164
      %p168 = scmp.eq.s32.totalorder %s23, 0
      %p169 = por %p167, %p168
      %p170 = scmp.ne.s32.totalorder %s162, %s164
      %p171 = scmp.eq.s32.totalorder %s28, 7
      %p172 = por %p170, %p171
      %p173 = scmp.ne.s32.totalorder %s164, %s165
      %p174 = scmp.eq.s32.totalorder %s28, 0
      %p175 = por %p173, %p174
      %p176 = scmp.ne.s32.totalorder %s164, %s165
      %p177 = scmp.eq.s32.totalorder %s29, 7
      %p178 = por %p176, %p177
      %p180 = scmp.ne.s32.totalorder %s165, %s179
      %p181 = scmp.eq.s32.totalorder %s29, 0
      %p182 = por %p180, %p181
      %s184 = sadd.s32 %s183, 1
      %p187 = scmp.eq.s32.totalorder %s23, 7
      %p188 = scmp.ne.s32.totalorder %s183, %s185
      %p189 = scmp.eq.s32.totalorder %s23, 0
      %p190 = por %p188, %p189
      %p191 = scmp.ne.s32.totalorder %s183, %s185
      %p192 = scmp.eq.s32.totalorder %s28, 7
      %p193 = por %p191, %p192
      %p194 = scmp.ne.s32.totalorder %s185, %s186
      %p195 = scmp.eq.s32.totalorder %s28, 0
      %p196 = por %p194, %p195
      %p197 = scmp.ne.s32.totalorder %s185, %s186
      %p198 = scmp.eq.s32.totalorder %s29, 7
      %p199 = por %p197, %p198
      %p201 = scmp.ne.s32.totalorder %s186, %s200
      %p202 = scmp.eq.s32.totalorder %s29, 0
      %p203 = por %p201, %p202
      %s204 = ssub.s32 %s32, %s41
      %p205 = scmp.eq.s32.totalorder %s204, 0
      %s207 = sadd.s32 %s206, 1
      %s208 = scalar_select %p205, %s206, %s207
      %p211 = pneg %p205
      %p212 = scmp.eq.s32.totalorder %s23, 7
      %p213 = por %p211, %p212
      %p214 = scmp.ne.s32.totalorder %s206, %s209
      %p215 = scmp.eq.s32.totalorder %s23, 0
      %p216 = por %p214, %p215
      %p217 = scmp.ne.s32.totalorder %s206, %s209
      %p218 = scmp.eq.s32.totalorder %s28, 7
      %p219 = por %p217, %p218
      %p220 = scmp.ne.s32.totalorder %s209, %s210
      %p221 = scmp.eq.s32.totalorder %s28, 0
      %p222 = por %p220, %p221
      %p223 = scmp.ne.s32.totalorder %s209, %s210
      %p224 = scmp.eq.s32.totalorder %s29, 7
      %p225 = por %p223, %p224
      %p227 = scmp.ne.s32.totalorder %s210, %s226
      %p228 = scmp.eq.s32.totalorder %s29, 0
      %p229 = por %p227, %p228
      %s230 = ssub.s32 %s32, %s41
      %p231 = scmp.eq.s32.totalorder %s230, 0
      %s233 = sadd.s32 %s232, 1
      %s234 = scalar_select %p231, %s232, %s233
      %p237 = pneg %p231
      %p238 = scmp.eq.s32.totalorder %s23, 7
      %p239 = por %p237, %p238
      %p240 = scmp.ne.s32.totalorder %s232, %s235
      %p241 = scmp.eq.s32.totalorder %s23, 0
      %p242 = por %p240, %p241
      %p243 = scmp.ne.s32.totalorder %s232, %s235
      %p244 = scmp.eq.s32.totalorder %s28, 7
      %p245 = por %p243, %p244
      %p246 = scmp.ne.s32.totalorder %s235, %s236
      %p247 = scmp.eq.s32.totalorder %s28, 0
      %p248 = por %p246, %p247
      %p249 = scmp.ne.s32.totalorder %s235, %s236
      %p250 = scmp.eq.s32.totalorder %s29, 7
      %p251 = por %p249, %p250
      %p253 = scmp.ne.s32.totalorder %s236, %s252
      %p254 = scmp.eq.s32.totalorder %s29, 0
      %p255 = por %p253, %p254
      %s257 = sadd.s32 %s256, 1
      %p260 = scmp.eq.s32.totalorder %s23, 7
      %p261 = scmp.ne.s32.totalorder %s256, %s258
      %p262 = scmp.eq.s32.totalorder %s23, 0
      %p263 = por %p261, %p262
      %p264 = scmp.ne.s32.totalorder %s256, %s258
      %p265 = scmp.eq.s32.totalorder %s28, 7
      %p266 = por %p264, %p265
      %p267 = scmp.ne.s32.totalorder %s258, %s259
      %p268 = scmp.eq.s32.totalorder %s28, 0
      %p269 = por %p267, %p268
      %p270 = scmp.ne.s32.totalorder %s258, %s259
      %p271 = scmp.eq.s32.totalorder %s29, 7
      %p272 = por %p270, %p271
      %p274 = scmp.ne.s32.totalorder %s259, %s273
      %p275 = scmp.eq.s32.totalorder %s29, 0
      %p276 = por %p274, %p275
      %s278 = sadd.s32 %s277, 1
      %p281 = scmp.eq.s32.totalorder %s23, 7
      %p282 = scmp.ne.s32.totalorder %s277, %s279
      %p283 = scmp.eq.s32.totalorder %s23, 0
      %p284 = por %p282, %p283
      %p285 = scmp.ne.s32.totalorder %s277, %s279
      %p286 = scmp.eq.s32.totalorder %s28, 7
      %p287 = por %p285, %p286
      %p288 = scmp.ne.s32.totalorder %s279, %s280
      %p289 = scmp.eq.s32.totalorder %s28, 0
      %p290 = por %p288, %p289
      %p291 = scmp.ne.s32.totalorder %s279, %s280
      %p292 = scmp.eq.s32.totalorder %s29, 7
      %p293 = por %p291, %p292
      %p295 = scmp.ne.s32.totalorder %s280, %s294
      %p296 = scmp.eq.s32.totalorder %s29, 0
      %p297 = por %p295, %p296
      %s298 = smul.u32 %s32, %s31
      %s299 = smul.u32 %s41, %s45
      %s300 = ssub.s32 %s30, %s49
      %s301 = ssub.s32 %s298, %s299
      %s302 = sor.u32 %s300, %s301
      %p303 = scmp.eq.s32.totalorder %s302, 0
      %s305 = sadd.s32 %s304, 1
      %s306 = scalar_select %p303, %s304, %s305
      %p309 = pneg %p303
      %p310 = scmp.eq.s32.totalorder %s23, 7
      %p311 = por %p309, %p310
      %p312 = scmp.ne.s32.totalorder %s304, %s307
      %p313 = scmp.eq.s32.totalorder %s23, 0
      %p314 = por %p312, %p313
      %p315 = scmp.ne.s32.totalorder %s304, %s307
      %p316 = scmp.eq.s32.totalorder %s28, 7
      %p317 = por %p315, %p316
      %p318 = scmp.ne.s32.totalorder %s307, %s308
      %p319 = scmp.eq.s32.totalorder %s28, 0
      %p320 = por %p318, %p319
      %p321 = scmp.ne.s32.totalorder %s307, %s308
      %p322 = scmp.eq.s32.totalorder %s29, 7
      %p323 = por %p321, %p322
      %p325 = scmp.ne.s32.totalorder %s308, %s324
      %p326 = scmp.eq.s32.totalorder %s29, 0
      %p327 = por %p325, %p326
      %p328 = scmp.le.s32.totalorder 1, %s23
      %p329 = scmp.lt.s32.totalorder %s23, 9
      %p330 = pnand %p328, %p329
      %p331 = pneg %p330
      // Predicated region
      $region9: #{tpu_custom_call.1} parent=5 // pred_check
        _
      $region10: #{tpu_custom_call.1} parent=5 // pred_check_branch
        %333 = sbr.rel (%p330) target = $region12
      $region11: #{tpu_custom_call.1} parent=5 // pred_region
        %s334 = ssub.s32 %s23, 1
        // Predicated region
        $region13: #{tpu_custom_call.1} parent=11 // pred_check
          %p335 = pneg %p91
        $region14: #{tpu_custom_call.1} parent=11 // pred_check_branch
          %337 = sbr.rel (%p335) target = $region16
        $region15: #{tpu_custom_call.1} parent=11 // pred_region
          %s339 = ssub.s32 1024, 1024
          %340 = vsyncadd [#allocation5], %s339
          %s341 = sshll.u32 [#allocation4], 4
          %s342 = int_to_ptr.vmem [resolvable:$true] %s341
          %347 = dma.hbm_to_vmem [thread:$0]  %s1, 1024, %s342, [#allocation5], 64, 64, 4
        $region16: #{tpu_custom_call.1} parent=11 // pred_fallthru
          _
        // Predicated region
        $region17: #{tpu_custom_call.1} parent=11 // pred_check
          %p348 = pneg %p112
        $region18: #{tpu_custom_call.1} parent=11 // pred_check_branch
          %350 = sbr.rel (%p348) target = $region20
        $region19: #{tpu_custom_call.1} parent=11 // pred_region
          _
        $region20: #{tpu_custom_call.1} parent=11 // pred_fallthru
          _
        // Predicated region
        $region21: #{tpu_custom_call.1} parent=11 // pred_check
          %p351 = pneg %p133
        $region22: #{tpu_custom_call.1} parent=11 // pred_check_branch
          %353 = sbr.rel (%p351) target = $region24
        $region23: #{tpu_custom_call.1} parent=11 // pred_region
          %s355 = ssub.s32 1024, 1024
          %356 = vsyncadd [#allocation8], %s355
          %s357 = sshll.u32 [#allocation7], 4
          %s358 = int_to_ptr.vmem [resolvable:$true] %s357
          %363 = dma.hbm_to_vmem [thread:$0]  %s3, 1024, %s358, [#allocation8], 64, 64, 4
        $region24: #{tpu_custom_call.1} parent=11 // pred_fallthru
          _
        // Predicated region
        $region25: #{tpu_custom_call.1} parent=11 // pred_check
          %p364 = pneg %p154
        $region26: #{tpu_custom_call.1} parent=11 // pred_check_branch
          %366 = sbr.rel (%p364) target = $region28
        $region27: #{tpu_custom_call.1} parent=11 // pred_region
          _
        $region28: #{tpu_custom_call.1} parent=11 // pred_fallthru
          _
        // Predicated region
        $region29: #{tpu_custom_call.1} parent=11 // pred_check
          %p367 = pneg %p175
        $region30: #{tpu_custom_call.1} parent=11 // pred_check_branch
          %369 = sbr.rel (%p367) target = $region32
        $region31: #{tpu_custom_call.1} parent=11 // pred_region
          %s371 = ssub.s32 1024, 1024
          %372 = vsyncadd [#allocation8], %s371
          %s373 = sshll.u32 [#allocation9], 4
          %s374 = int_to_ptr.vmem [resolvable:$true] %s373
          %379 = dma.hbm_to_vmem [thread:$0]  %s5, 1024, %s374, [#allocation8], 64, 64, 4
        $region32: #{tpu_custom_call.1} parent=11 // pred_fallthru
          _
        // Predicated region
        $region33: #{tpu_custom_call.1} parent=11 // pred_check
          %p380 = pneg %p196
        $region34: #{tpu_custom_call.1} parent=11 // pred_check_branch
          %382 = sbr.rel (%p380) target = $region36
        $region35: #{tpu_custom_call.1} parent=11 // pred_region
          _
        $region36: #{tpu_custom_call.1} parent=11 // pred_fallthru
          _
        // Predicated region
        $region37: #{tpu_custom_call.1} parent=11 // pred_check
          %p383 = pneg %p269
        $region38: #{tpu_custom_call.1} parent=11 // pred_check_branch
          %385 = sbr.rel (%p383) target = $region40
        $region39: #{tpu_custom_call.1} parent=11 // pred_region
          %s387 = ssub.s32 1024, 1024
          %388 = vsyncadd [#allocation11], %s387
          %s389 = sshll.u32 [#allocation10], 4
          %s390 = int_to_ptr.vmem [resolvable:$true] %s389
          %395 = dma.hbm_to_vmem [thread:$0]  %s9, 1024, %s390, [#allocation11], 64, 64, 4
        $region40: #{tpu_custom_call.1} parent=11 // pred_fallthru
          _
        // Predicated region
        $region41: #{tpu_custom_call.1} parent=11 // pred_check
          %p396 = pneg %p290
        $region42: #{tpu_custom_call.1} parent=11 // pred_check_branch
          %398 = sbr.rel (%p396) target = $region44
        $region43: #{tpu_custom_call.1} parent=11 // pred_region
          _
        $region44: #{tpu_custom_call.1} parent=11 // pred_fallthru
          _
      $region12: #{tpu_custom_call.1} parent=5 // pred_fallthru
        _
      %p399 = scmp.lt.s32.totalorder %s23, 8
      // Predicated region
      $region45: #{tpu_custom_call.1} parent=5 // pred_check
        %p400 = pneg %p399
      $region46: #{tpu_custom_call.1} parent=5 // pred_check_branch
        %402 = sbr.rel (%p400) target = $region48
      $region47: #{tpu_custom_call.1} parent=5 // pred_region
        // Predicated region
        $region49: #{tpu_custom_call.1} parent=47 // pred_check
          %p403 = pneg %p64
        $region50: #{tpu_custom_call.1} parent=47 // pred_check_branch
          %405 = sbr.rel (%p403) target = $region52
        $region51: #{tpu_custom_call.1} parent=47 // pred_region
          %s406 = smul.u32 4, %s32
          %p407 = scmp.lt.s32.totalorder %s30, 1
          %s408 = scalar_select %p407, %s30, 1
          %p409 = scmp.lt.s32.totalorder %s406, 7
          %s410 = scalar_select %p409, %s406, 7
          %s411 = smul.addr %s408, 8
          %s412 = sadd.s32 %s410, %s411
          %s413 = smul.addr %s412, 4
          %s414 = scalar_lea.vmem %s0, %s413
          %s415 = smul.u32 4, %s32
        $region52: #{tpu_custom_call.1} parent=47 // pred_fallthru
          _
        // Predicated region
        $region53: #{tpu_custom_call.1} parent=47 // pred_check
          %p416 = pneg %p216
        $region54: #{tpu_custom_call.1} parent=47 // pred_check_branch
          %418 = sbr.rel (%p416) target = $region56
        $region55: #{tpu_custom_call.1} parent=47 // pred_region
          %s419 = smul.u32 4, %s32
          %p420 = scmp.lt.s32.totalorder %s419, 7
          %s421 = scalar_select %p420, %s419, 7
          %s422 = smul.addr %s421, 4
          %s423 = scalar_lea.vmem %s7, %s422
          %s424 = smul.u32 4, %s32
        $region56: #{tpu_custom_call.1} parent=47 // pred_fallthru
          _
        // Predicated region
        $region57: #{tpu_custom_call.1} parent=47 // pred_check
          %p425 = pneg %p242
        $region58: #{tpu_custom_call.1} parent=47 // pred_check_branch
          %427 = sbr.rel (%p425) target = $region60
        $region59: #{tpu_custom_call.1} parent=47 // pred_region
          %s428 = smul.u32 4, %s32
          %p429 = scmp.lt.s32.totalorder %s428, 7
          %s430 = scalar_select %p429, %s428, 7
          %s431 = smul.addr %s430, 4
          %s432 = scalar_lea.vmem %s8, %s431
          %s433 = smul.u32 4, %s32
        $region60: #{tpu_custom_call.1} parent=47 // pred_fallthru
          _
      $region48: #{tpu_custom_call.1} parent=5 // pred_fallthru
        _
      %p434 = scmp.le.s32.totalorder 1, %s23
      %p435 = scmp.lt.s32.totalorder %s23, 9
      %p436 = pnand %p434, %p435
      %p437 = pneg %p436
      // Predicated region
      $region61: #{tpu_custom_call.1} parent=5 // pred_check
        _
      $region62: #{tpu_custom_call.1} parent=5 // pred_check_branch
        %439 = sbr.rel (%p436) target = $region64
      $region63: #{tpu_custom_call.1} parent=5 // pred_region
        %s440 = ssub.s32 %s23, 1
        // Predicated region
        $region65: #{tpu_custom_call.1} parent=63 // pred_check
          %p441 = pneg %p91
        $region66: #{tpu_custom_call.1} parent=63 // pred_check_branch
          %443 = sbr.rel (%p441) target = $region68
        $region67: #{tpu_custom_call.1} parent=63 // pred_region
          %444 = dma.done [#allocation5], 1024
        $region68: #{tpu_custom_call.1} parent=63 // pred_fallthru
          _
        // Predicated region
        $region69: #{tpu_custom_call.1} parent=63 // pred_check
          %p445 = pneg %p133
        $region70: #{tpu_custom_call.1} parent=63 // pred_check_branch
          %447 = sbr.rel (%p445) target = $region72
        $region71: #{tpu_custom_call.1} parent=63 // pred_region
          %448 = dma.done [#allocation8], 1024
        $region72: #{tpu_custom_call.1} parent=63 // pred_fallthru
          _
        // Predicated region
        $region73: #{tpu_custom_call.1} parent=63 // pred_check
          %p449 = pneg %p175
        $region74: #{tpu_custom_call.1} parent=63 // pred_check_branch
          %451 = sbr.rel (%p449) target = $region76
        $region75: #{tpu_custom_call.1} parent=63 // pred_region
          %452 = dma.done [#allocation8], 1024
        $region76: #{tpu_custom_call.1} parent=63 // pred_fallthru
          _
        // Predicated region
        $region77: #{tpu_custom_call.1} parent=63 // pred_check
          %p453 = pneg %p269
        $region78: #{tpu_custom_call.1} parent=63 // pred_check_branch
          %455 = sbr.rel (%p453) target = $region80
        $region79: #{tpu_custom_call.1} parent=63 // pred_region
          %456 = dma.done [#allocation11], 1024
        $region80: #{tpu_custom_call.1} parent=63 // pred_fallthru
          _
        %s457 = smul.u32 4, %s35
        %p458 = scmp.lt.s32.totalorder %s33, 1
        %s459 = scalar_select %p458, %s33, 1
        %p460 = scmp.lt.s32.totalorder %s457, 7
        %s461 = scalar_select %p460, %s457, 7
        %s462 = smul.addr %s459, 8
        %s463 = sadd.s32 %s461, %s462
        %s464 = smul.addr %s463, 4
        %s465 = scalar_lea.vmem %s0, %s464
        %p466 = pneg %p70
        %p467 = pneg %p67
        %p468 = pneg %p91
        %p469 = pneg %p88
        %p470 = pneg %p112
        %p471 = pneg %p109
        %p472 = pneg %p133
        %p473 = pneg %p130
        %p474 = pneg %p154
        %p475 = pneg %p151
        %p476 = pneg %p175
        %p477 = pneg %p172
        %p478 = pneg %p196
        %p479 = pneg %p193
        %s480 = smul.u32 4, %s35
        %p481 = scmp.lt.s32.totalorder %s480, 7
        %s482 = scalar_select %p481, %s480, 7
        %s483 = smul.addr %s482, 4
        %s484 = scalar_lea.vmem %s7, %s483
        %p485 = pneg %p222
        %p486 = pneg %p219
        %s487 = smul.u32 4, %s35
        %p488 = scmp.lt.s32.totalorder %s487, 7
        %s489 = scalar_select %p488, %s487, 7
        %s490 = smul.addr %s489, 4
        %s491 = scalar_lea.vmem %s8, %s490
        %p492 = pneg %p248
        %p493 = pneg %p245
        %p494 = pneg %p269
        %p495 = pneg %p266
        %p496 = pneg %p290
        %p497 = pneg %p287
        %p498 = pneg %p320
        %p499 = pneg %p317
        %s500 = sand.u32 %s307, 1
        %s501 = scalar_lea.sflag [#allocation6], %s500
        %s502 = sand.u32 %s307, 1
        %s503 = smul.addr %s502, 32
        %s504 = scalar_lea.vmem [#allocation12], %s503
        %s505 = smul.u32 4, %s35
        %p506 = scmp.lt.s32.totalorder %s33, 1
        %s507 = scalar_select %p506, %s33, 1
        %p508 = scmp.lt.s32.totalorder %s505, 7
        %s509 = scalar_select %p508, %s505, 7
        %s510 = smul.addr %s507, 8
        %s511 = sadd.s32 %s509, %s510
        %s512 = smul.addr %s511, 4
        %s513 = scalar_lea.vmem %s0, %s512
        %s514 = smul.u32 4, %s35
        %s515 = smul.u32 4, %s35
        %p516 = scmp.lt.s32.totalorder %s515, 7
        %s517 = scalar_select %p516, %s515, 7
        %s518 = smul.addr %s517, 4
        %s519 = scalar_lea.vmem %s7, %s518
        %s520 = smul.u32 4, %s35
        %s521 = smul.u32 4, %s35
        %p522 = scmp.lt.s32.totalorder %s521, 7
        %s523 = scalar_select %p522, %s521, 7
        %s524 = smul.addr %s523, 4
        %s525 = scalar_lea.vmem %s8, %s524
        %s526 = smul.u32 4, %s35
        %s527 = smul.u32 %s35, %s34
        %s528 = smul.u32 4, %s527
        %v530 = vld [vmem:[%s513] sm:$0xf]
        %v531 = vld [vmem:[%s513 + $0x4] sm:$0xf]
        %v532 = vld [vmem:[%s513 + $0x8] sm:$0xf]
        %v533 = vld [vmem:[%s513 + $0xc] sm:$0xf]
        %p534 = scmp.eq.s32.totalorder %s34, 0
        // Predicated region
        $region81: #{tpu_custom_call.1} parent=63 // pred_check
          %p535 = pneg %p534
        $region82: #{tpu_custom_call.1} parent=63 // pred_check_branch
          %537 = sbr.rel (%p535) target = $region84
        $region83: #{tpu_custom_call.1} parent=63 // pred_region
          %p538 = scmp.eq.s32.totalorder %s35, 0
          // Predicated region
          $region85: #{tpu_custom_call.1} parent=83 // pred_check
            %p539 = pneg %p538
          $region86: #{tpu_custom_call.1} parent=83 // pred_check_branch
            %541 = sbr.rel (%p539) target = $region88
          $region87: #{tpu_custom_call.1} parent=83 // pred_region
            %542 = vst [vmem:[#allocation2] sm:$0xff] 0.0
            %543 = vst [vmem:[#allocation2 + $0x8] sm:$0xff] 0.0
            %544 = vst [vmem:[#allocation3] sm:$0xff] 0.0
            %545 = vst [vmem:[#allocation3 + $0x8] sm:$0xff] 0.0
          $region88: #{tpu_custom_call.1} parent=83 // pred_fallthru
            _
          %v546 = vld [vmem:[#allocation7] sm:$0xf]
          %v547 = vld [vmem:[#allocation7 + $0x4] sm:$0xf]
          %v548 = vld [vmem:[#allocation7 + $0x8] sm:$0xf]
          %v549 = vld [vmem:[#allocation7 + $0xc] sm:$0xf]
          %v550 = vld [vmem:[#allocation7 + $0x10] sm:$0xf]
          %v551 = vld [vmem:[#allocation7 + $0x14] sm:$0xf]
          %v552 = vld [vmem:[#allocation7 + $0x18] sm:$0xf]
          %v553 = vld [vmem:[#allocation7 + $0x1c] sm:$0xf]
          %v554 = vld [vmem:[#allocation7 + $0x20] sm:$0xf]
          %v555 = vld [vmem:[#allocation7 + $0x24] sm:$0xf]
          %v556 = vld [vmem:[#allocation7 + $0x28] sm:$0xf]
          %v557 = vld [vmem:[#allocation7 + $0x2c] sm:$0xf]
          %v558 = vld [vmem:[#allocation7 + $0x30] sm:$0xf]
          %v559 = vld [vmem:[#allocation7 + $0x34] sm:$0xf]
          %v560 = vld [vmem:[#allocation7 + $0x38] sm:$0xf]
          %v561 = vld [vmem:[#allocation7 + $0x3c] sm:$0xf]
          %v562 = vld [vmem:[%s4] sm:$0x1]
          %v564 = vlaneseq
          %v565 = vshrl.u32 %v564, 7
          %v566 = vsub.s32 0, %v565
          %v567 = vrot.slane %v562, %v566
          %v573 = vunpack.c.l.b16 %v530
          %v574 = vunpack.c.l.b16 %v531
          %v575 = vunpack.c.l.b16 %v532
          %v576 = vunpack.c.l.b16 %v533
          %v577 = vpack.c.b16 %v574, %v573
          %v578 = vpack.c.b16 %v576, %v575
          %v597 = vunpack.c.l.b16 %v546
          %v598 = vunpack.c.l.b16 %v547
          %v599 = vunpack.c.l.b16 %v548
          %v600 = vunpack.c.l.b16 %v549
          %v601 = vunpack.c.l.b16 %v550
          %v602 = vunpack.c.l.b16 %v551
          %v603 = vunpack.c.l.b16 %v552
          %v604 = vunpack.c.l.b16 %v553
          %v605 = vunpack.c.l.b16 %v554
          %v606 = vunpack.c.l.b16 %v555
          %v607 = vunpack.c.l.b16 %v556
          %v608 = vunpack.c.l.b16 %v557
          %v609 = vunpack.c.l.b16 %v558
          %v610 = vunpack.c.l.b16 %v559
          %v611 = vunpack.c.l.b16 %v560
          %v612 = vunpack.c.l.b16 %v561
          %v613 = vpack.c.b16 %v598, %v597
          %v614 = vpack.c.b16 %v600, %v599
          %v615 = vpack.c.b16 %v602, %v601
          %v616 = vpack.c.b16 %v604, %v603
          %v617 = vpack.c.b16 %v606, %v605
          %v618 = vpack.c.b16 %v608, %v607
          %v619 = vpack.c.b16 %v610, %v609
          %v620 = vpack.c.b16 %v612, %v611
          %629 = vmatprep.subr.bf16.mxu0 0
          %630 = vmatpush1.bf16.msra.mxu0 %v620
          %631 = vmatprep.subr.bf16.mxu0 0
          %632 = vmatpush1.bf16.msra.mxu0 %v619
          %633 = vmatprep.subr.bf16.mxu0 0
          %634 = vmatpush1.bf16.msra.mxu0 %v618
          %635 = vmatprep.subr.bf16.mxu0 0
          %636 = vmatpush1.bf16.msra.mxu0 %v617
          %637 = vmatprep.subr.bf16.mxu0 0
          %638 = vmatpush1.bf16.msra.mxu0 %v616
          %639 = vmatprep.subr.bf16.mxu0 0
          %640 = vmatpush1.bf16.msra.mxu0 %v615
          %641 = vmatprep.subr.bf16.mxu0 0
          %642 = vmatpush1.bf16.msra.mxu0 %v614
          %643 = vmatprep.subr.bf16.mxu0 0
          %644 = vmatpush1.bf16.msra.mxu0 %v613
          %645 = vmatprep.subr.bf16.mxu0 0
          %646 = vmatpush2.bf16.msra.mxu0 0
          %647 = vmatprep.subr.bf16.mxu0 0
          %648 = vmatpush2.bf16.msra.mxu0 0
          %649 = vmatprep.subr.bf16.mxu0 0
          %650 = vmatpush2.bf16.msra.mxu0 0
          %651 = vmatprep.subr.bf16.mxu0 0
          %652 = vmatpush2.bf16.msra.mxu0 0
          %653 = vmatprep.subr.bf16.mxu0 0
          %654 = vmatpush2.bf16.msra.mxu0 0
          %655 = vmatprep.subr.bf16.mxu0 0
          %656 = vmatpush2.bf16.msra.mxu0 0
          %657 = vmatprep.subr.bf16.mxu0 0
          %658 = vmatpush2.bf16.msra.mxu0 0
          %659 = vmatprep.subr.bf16.mxu0 0
          %660 = vmatpush2.bf16.msra.mxu0 0
          %661 = vmatprep.mubr.bf16.mxu0 0
          %662 = vmatmul.mubr.bf16.gmra.mxu0 %v577
          %v663 = vpop.f32.mrf.mxu0
          %v664 = vadd.f32 %v567, %v663
          %v665 = vpop.f32.mrf.mxu0
          %v666 = vpop.f32.mrf.mxu0
          %v667 = vadd.f32 %v567, %v666
          %v668 = vpop.f32.mrf.mxu0
          %669 = vmatprep.mubr.bf16.mxu0 0
          %670 = vmatmul.mubr.bf16.gmra.mxu0 %v578
          %v671 = vpop.f32.mrf.mxu0
          %v672 = vadd.f32 %v567, %v671
          %v673 = vpop.f32.mrf.mxu0
          %v674 = vpop.f32.mrf.mxu0
          %v675 = vadd.f32 %v567, %v674
          %v676 = vpop.f32.mrf.mxu0
          %677 = vdwg.mxu0
          %v678 = vld [vmem:[#allocation9] sm:$0xf]
          %v679 = vld [vmem:[#allocation9 + $0x4] sm:$0xf]
          %v680 = vld [vmem:[#allocation9 + $0x8] sm:$0xf]
          %v681 = vld [vmem:[#allocation9 + $0xc] sm:$0xf]
          %v682 = vld [vmem:[#allocation9 + $0x10] sm:$0xf]
          %v683 = vld [vmem:[#allocation9 + $0x14] sm:$0xf]
          %v684 = vld [vmem:[#allocation9 + $0x18] sm:$0xf]
          %v685 = vld [vmem:[#allocation9 + $0x1c] sm:$0xf]
          %v686 = vld [vmem:[#allocation9 + $0x20] sm:$0xf]
          %v687 = vld [vmem:[#allocation9 + $0x24] sm:$0xf]
          %v688 = vld [vmem:[#allocation9 + $0x28] sm:$0xf]
          %v689 = vld [vmem:[#allocation9 + $0x2c] sm:$0xf]
          %v690 = vld [vmem:[#allocation9 + $0x30] sm:$0xf]
          %v691 = vld [vmem:[#allocation9 + $0x34] sm:$0xf]
          %v692 = vld [vmem:[#allocation9 + $0x38] sm:$0xf]
          %v693 = vld [vmem:[#allocation9 + $0x3c] sm:$0xf]
          %v694 = vld [vmem:[%s6] sm:$0x1]
          %v696 = vlaneseq
          %v697 = vshrl.u32 %v696, 7
          %v698 = vsub.s32 0, %v697
          %v699 = vrot.slane %v694, %v698
          %v717 = vunpack.c.l.b16 %v678
          %v718 = vunpack.c.l.b16 %v679
          %v719 = vunpack.c.l.b16 %v680
          %v720 = vunpack.c.l.b16 %v681
          %v721 = vunpack.c.l.b16 %v682
          %v722 = vunpack.c.l.b16 %v683
          %v723 = vunpack.c.l.b16 %v684
          %v724 = vunpack.c.l.b16 %v685
          %v725 = vunpack.c.l.b16 %v686
          %v726 = vunpack.c.l.b16 %v687
          %v727 = vunpack.c.l.b16 %v688
          %v728 = vunpack.c.l.b16 %v689
          %v729 = vunpack.c.l.b16 %v690
          %v730 = vunpack.c.l.b16 %v691
          %v731 = vunpack.c.l.b16 %v692
          %v732 = vunpack.c.l.b16 %v693
          %v733 = vpack.c.b16 %v718, %v717
          %v734 = vpack.c.b16 %v720, %v719
          %v735 = vpack.c.b16 %v722, %v721
          %v736 = vpack.c.b16 %v724, %v723
          %v737 = vpack.c.b16 %v726, %v725
          %v738 = vpack.c.b16 %v728, %v727
          %v739 = vpack.c.b16 %v730, %v729
          %v740 = vpack.c.b16 %v732, %v731
          %749 = vmatprep.subr.bf16.mxu0 0
          %750 = vmatpush1.bf16.msra.mxu0 %v740
          %751 = vmatprep.subr.bf16.mxu0 0
          %752 = vmatpush1.bf16.msra.mxu0 %v739
          %753 = vmatprep.subr.bf16.mxu0 0
          %754 = vmatpush1.bf16.msra.mxu0 %v738
          %755 = vmatprep.subr.bf16.mxu0 0
          %756 = vmatpush1.bf16.msra.mxu0 %v737
          %757 = vmatprep.subr.bf16.mxu0 0
          %758 = vmatpush1.bf16.msra.mxu0 %v736
          %759 = vmatprep.subr.bf16.mxu0 0
          %760 = vmatpush1.bf16.msra.mxu0 %v735
          %761 = vmatprep.subr.bf16.mxu0 0
          %762 = vmatpush1.bf16.msra.mxu0 %v734
          %763 = vmatprep.subr.bf16.mxu0 0
          %764 = vmatpush1.bf16.msra.mxu0 %v733
          %765 = vmatprep.subr.bf16.mxu0 0
          %766 = vmatpush2.bf16.msra.mxu0 0
          %767 = vmatprep.subr.bf16.mxu0 0
          %768 = vmatpush2.bf16.msra.mxu0 0
          %769 = vmatprep.subr.bf16.mxu0 0
          %770 = vmatpush2.bf16.msra.mxu0 0
          %771 = vmatprep.subr.bf16.mxu0 0
          %772 = vmatpush2.bf16.msra.mxu0 0
          %773 = vmatprep.subr.bf16.mxu0 0
          %774 = vmatpush2.bf16.msra.mxu0 0
          %775 = vmatprep.subr.bf16.mxu0 0
          %776 = vmatpush2.bf16.msra.mxu0 0
          %777 = vmatprep.subr.bf16.mxu0 0
          %778 = vmatpush2.bf16.msra.mxu0 0
          %779 = vmatprep.subr.bf16.mxu0 0
          %780 = vmatpush2.bf16.msra.mxu0 0
          %781 = vmatprep.mubr.bf16.mxu0 0
          %782 = vmatmul.mubr.bf16.gmra.mxu0 %v577
          %v783 = vpop.f32.mrf.mxu0
          %v784 = vadd.f32 %v699, %v783
          %v785 = vpop.f32.mrf.mxu0
          %v786 = vpop.f32.mrf.mxu0
          %v787 = vadd.f32 %v699, %v786
          %v788 = vpop.f32.mrf.mxu0
          %789 = vmatprep.mubr.bf16.mxu0 0
          %790 = vmatmul.mubr.bf16.gmra.mxu0 %v578
          %v791 = vpop.f32.mrf.mxu0
          %v792 = vadd.f32 %v699, %v791
          %v793 = vpop.f32.mrf.mxu0
          %v794 = vpop.f32.mrf.mxu0
          %v795 = vadd.f32 %v699, %v794
          %v796 = vpop.f32.mrf.mxu0
          %797 = vdwg.mxu0
          %v798 = vld [vmem:[#allocation2] sm:$0xff]
          %v799 = vld [vmem:[#allocation2 + $0x8] sm:$0xff]
          %v800 = vld [vmem:[%s519] sm:$0xf]
          %v801 = vld [vmem:[%s519 + $0x4] sm:$0xf]
          %v802 = vld [vmem:[%s519 + $0x8] sm:$0xf]
          %v803 = vld [vmem:[%s519 + $0xc] sm:$0xf]
          %v804 = vpack.c.bf16 %v667, %v664
          %v805 = vpack.c.bf16 %v675, %v672
          %v810 = vunpack.c.l.b16 %v800
          %v811 = vunpack.c.l.b16 %v801
          %v812 = vunpack.c.l.b16 %v802
          %v813 = vunpack.c.l.b16 %v803
          %v814 = vpack.c.b16 %v811, %v810
          %v815 = vpack.c.b16 %v813, %v812
          %818 = vxpose.xlu0.c.b16.start [1/8] %v814, 128
          %819 = vxpose.xlu0.c.b16.cont [2/8] %v815, 128
          %820 = vxpose.xlu0.c.b16.cont [3/8] 0, 128
          %821 = vxpose.xlu0.c.b16.cont [4/8] 0, 128
          %822 = vxpose.xlu0.c.b16.cont [5/8] 0, 128
          %823 = vxpose.xlu0.c.b16.cont [6/8] 0, 128
          %824 = vxpose.xlu0.c.b16.cont [7/8] 0, 128
          %825 = vxpose.xlu0.c.b16.end [8/8] 0, 128
          %v826 = vpop.trf.xlu0
          %v827 = vpop.trf.xlu0
          %v828 = vpop.trf.xlu0
          %v829 = vpop.trf.xlu0
          %v830 = vpop.trf.xlu0
          %v831 = vpop.trf.xlu0
          %v832 = vpop.trf.xlu0
          %v833 = vpop.trf.xlu0
          %vm834 = vcmask 261120
          %v836 = vsel %vm834, %v826, 0
          %838 = vmatprep.subr.bf16.mxu0 0
          %839 = vmatpush1.bf16.msra.mxu0 0
          %840 = vmatprep.subr.bf16.mxu0 0
          %841 = vmatpush1.bf16.msra.mxu0 0
          %842 = vmatprep.subr.bf16.mxu0 0
          %843 = vmatpush1.bf16.msra.mxu0 0
          %844 = vmatprep.subr.bf16.mxu0 0
          %845 = vmatpush1.bf16.msra.mxu0 0
          %846 = vmatprep.subr.bf16.mxu0 0
          %847 = vmatpush1.bf16.msra.mxu0 0
          %848 = vmatprep.subr.bf16.mxu0 0
          %849 = vmatpush1.bf16.msra.mxu0 0
          %850 = vmatprep.subr.bf16.mxu0 0
          %851 = vmatpush1.bf16.msra.mxu0 %v805
          %852 = vmatprep.subr.bf16.mxu0 0
          %853 = vmatpush1.bf16.msra.mxu0 %v804
          %854 = vmatprep.subr.bf16.mxu0 0
          %855 = vmatpush2.bf16.msra.mxu0 0
          %856 = vmatprep.subr.bf16.mxu0 0
          %857 = vmatpush2.bf16.msra.mxu0 0
          %858 = vmatprep.subr.bf16.mxu0 0
          %859 = vmatpush2.bf16.msra.mxu0 0
          %860 = vmatprep.subr.bf16.mxu0 0
          %861 = vmatpush2.bf16.msra.mxu0 0
          %862 = vmatprep.subr.bf16.mxu0 0
          %863 = vmatpush2.bf16.msra.mxu0 0
          %864 = vmatprep.subr.bf16.mxu0 0
          %865 = vmatpush2.bf16.msra.mxu0 0
          %866 = vmatprep.subr.bf16.mxu0 0
          %867 = vmatpush2.bf16.msra.mxu0 0
          %868 = vmatprep.subr.bf16.mxu0 0
          %869 = vmatpush2.bf16.msra.mxu0 0
          %870 = vmatprep.mubr.bf16.mxu0 0
          %871 = vmatmul.mubr.bf16.gmra.mxu0 %v836
          %v872 = vpop.f32.mrf.mxu0
          %v873 = vadd.f32 0.0, %v872
          %v874 = vpop.f32.mrf.mxu0
          %v875 = vpop.f32.mrf.mxu0
          %v876 = vadd.f32 0.0, %v875
          %v877 = vpop.f32.mrf.mxu0
          %878 = vdwg.mxu0
          %v879 = vadd.f32 %v798, %v873
          %v880 = vadd.f32 %v799, %v876
          %881 = vst [vmem:[#allocation2] sm:$0xff] %v879
          %882 = vst [vmem:[#allocation2 + $0x8] sm:$0xff] %v880
          %v883 = vld [vmem:[#allocation3] sm:$0xff]
          %v884 = vld [vmem:[#allocation3 + $0x8] sm:$0xff]
          %v885 = vld [vmem:[%s525] sm:$0xf]
          %v886 = vld [vmem:[%s525 + $0x4] sm:$0xf]
          %v887 = vld [vmem:[%s525 + $0x8] sm:$0xf]
          %v888 = vld [vmem:[%s525 + $0xc] sm:$0xf]
          %v889 = vpack.c.bf16 %v787, %v784
          %v890 = vpack.c.bf16 %v795, %v792
          %v895 = vunpack.c.l.b16 %v885
          %v896 = vunpack.c.l.b16 %v886
          %v897 = vunpack.c.l.b16 %v887
          %v898 = vunpack.c.l.b16 %v888
          %v899 = vpack.c.b16 %v896, %v895
          %v900 = vpack.c.b16 %v898, %v897
          %903 = vxpose.xlu0.c.b16.start [1/8] %v899, 128
          %904 = vxpose.xlu0.c.b16.cont [2/8] %v900, 128
          %905 = vxpose.xlu0.c.b16.cont [3/8] 0, 128
          %906 = vxpose.xlu0.c.b16.cont [4/8] 0, 128
          %907 = vxpose.xlu0.c.b16.cont [5/8] 0, 128
          %908 = vxpose.xlu0.c.b16.cont [6/8] 0, 128
          %909 = vxpose.xlu0.c.b16.cont [7/8] 0, 128
          %910 = vxpose.xlu0.c.b16.end [8/8] 0, 128
          %v911 = vpop.trf.xlu0
          %v912 = vpop.trf.xlu0
          %v913 = vpop.trf.xlu0
          %v914 = vpop.trf.xlu0
          %v915 = vpop.trf.xlu0
          %v916 = vpop.trf.xlu0
          %v917 = vpop.trf.xlu0
          %v918 = vpop.trf.xlu0
          %v920 = vsel %vm834, %v911, 0
          %922 = vmatprep.subr.bf16.mxu0 0
          %923 = vmatpush1.bf16.msra.mxu0 0
          %924 = vmatprep.subr.bf16.mxu0 0
          %925 = vmatpush1.bf16.msra.mxu0 0
          %926 = vmatprep.subr.bf16.mxu0 0
          %927 = vmatpush1.bf16.msra.mxu0 0
          %928 = vmatprep.subr.bf16.mxu0 0
          %929 = vmatpush1.bf16.msra.mxu0 0
          %930 = vmatprep.subr.bf16.mxu0 0
          %931 = vmatpush1.bf16.msra.mxu0 0
          %932 = vmatprep.subr.bf16.mxu0 0
          %933 = vmatpush1.bf16.msra.mxu0 0
          %934 = vmatprep.subr.bf16.mxu0 0
          %935 = vmatpush1.bf16.msra.mxu0 %v890
          %936 = vmatprep.subr.bf16.mxu0 0
          %937 = vmatpush1.bf16.msra.mxu0 %v889
          %938 = vmatprep.subr.bf16.mxu0 0
          %939 = vmatpush2.bf16.msra.mxu0 0
          %940 = vmatprep.subr.bf16.mxu0 0
          %941 = vmatpush2.bf16.msra.mxu0 0
          %942 = vmatprep.subr.bf16.mxu0 0
          %943 = vmatpush2.bf16.msra.mxu0 0
          %944 = vmatprep.subr.bf16.mxu0 0
          %945 = vmatpush2.bf16.msra.mxu0 0
          %946 = vmatprep.subr.bf16.mxu0 0
          %947 = vmatpush2.bf16.msra.mxu0 0
          %948 = vmatprep.subr.bf16.mxu0 0
          %949 = vmatpush2.bf16.msra.mxu0 0
          %950 = vmatprep.subr.bf16.mxu0 0
          %951 = vmatpush2.bf16.msra.mxu0 0
          %952 = vmatprep.subr.bf16.mxu0 0
          %953 = vmatpush2.bf16.msra.mxu0 0
          %954 = vmatprep.mubr.bf16.mxu0 0
          %955 = vmatmul.mubr.bf16.gmra.mxu0 %v920
          %v956 = vpop.f32.mrf.mxu0
          %v957 = vadd.f32 0.0, %v956
          %v958 = vpop.f32.mrf.mxu0
          %v959 = vpop.f32.mrf.mxu0
          %v960 = vadd.f32 0.0, %v959
          %v961 = vpop.f32.mrf.mxu0
          %962 = vdwg.mxu0
          %v963 = vadd.f32 %v883, %v957
          %v964 = vadd.f32 %v884, %v960
          %965 = vst [vmem:[#allocation3] sm:$0xff] %v963
          %966 = vst [vmem:[#allocation3 + $0x8] sm:$0xff] %v964
        $region84: #{tpu_custom_call.1} parent=63 // pred_fallthru
          _
        %p967 = scmp.eq.s32.totalorder %s34, 1
        // Predicated region
        $region89: #{tpu_custom_call.1} parent=63 // pred_check
          %p968 = pneg %p967
        $region90: #{tpu_custom_call.1} parent=63 // pred_check_branch
          %970 = sbr.rel (%p968) target = $region92
        $region91: #{tpu_custom_call.1} parent=63 // pred_region
          %v971 = vld [vmem:[#allocation4] sm:$0xf]
          %v972 = vld [vmem:[#allocation4 + $0x4] sm:$0xf]
          %v973 = vld [vmem:[#allocation4 + $0x8] sm:$0xf]
          %v974 = vld [vmem:[#allocation4 + $0xc] sm:$0xf]
          %v975 = vld [vmem:[#allocation4 + $0x10] sm:$0xf]
          %v976 = vld [vmem:[#allocation4 + $0x14] sm:$0xf]
          %v977 = vld [vmem:[#allocation4 + $0x18] sm:$0xf]
          %v978 = vld [vmem:[#allocation4 + $0x1c] sm:$0xf]
          %v979 = vld [vmem:[#allocation4 + $0x20] sm:$0xf]
          %v980 = vld [vmem:[#allocation4 + $0x24] sm:$0xf]
          %v981 = vld [vmem:[#allocation4 + $0x28] sm:$0xf]
          %v982 = vld [vmem:[#allocation4 + $0x2c] sm:$0xf]
          %v983 = vld [vmem:[#allocation4 + $0x30] sm:$0xf]
          %v984 = vld [vmem:[#allocation4 + $0x34] sm:$0xf]
          %v985 = vld [vmem:[#allocation4 + $0x38] sm:$0xf]
          %v986 = vld [vmem:[#allocation4 + $0x3c] sm:$0xf]
          %v987 = vld [vmem:[%s2] sm:$0x1]
          %v989 = vlaneseq
          %v990 = vshrl.u32 %v989, 7
          %v991 = vsub.s32 0, %v990
          %v992 = vrot.slane %v987, %v991
          %v998 = vunpack.c.l.b16 %v530
          %v999 = vunpack.c.l.b16 %v531
          %v1000 = vunpack.c.l.b16 %v532
          %v1001 = vunpack.c.l.b16 %v533
          %v1002 = vpack.c.b16 %v999, %v998
          %v1003 = vpack.c.b16 %v1001, %v1000
          %v1022 = vunpack.c.l.b16 %v971
          %v1023 = vunpack.c.l.b16 %v972
          %v1024 = vunpack.c.l.b16 %v973
          %v1025 = vunpack.c.l.b16 %v974
          %v1026 = vunpack.c.l.b16 %v975
          %v1027 = vunpack.c.l.b16 %v976
          %v1028 = vunpack.c.l.b16 %v977
          %v1029 = vunpack.c.l.b16 %v978
          %v1030 = vunpack.c.l.b16 %v979
          %v1031 = vunpack.c.l.b16 %v980
          %v1032 = vunpack.c.l.b16 %v981
          %v1033 = vunpack.c.l.b16 %v982
          %v1034 = vunpack.c.l.b16 %v983
          %v1035 = vunpack.c.l.b16 %v984
          %v1036 = vunpack.c.l.b16 %v985
          %v1037 = vunpack.c.l.b16 %v986
          %v1038 = vpack.c.b16 %v1023, %v1022
          %v1039 = vpack.c.b16 %v1025, %v1024
          %v1040 = vpack.c.b16 %v1027, %v1026
          %v1041 = vpack.c.b16 %v1029, %v1028
          %v1042 = vpack.c.b16 %v1031, %v1030
          %v1043 = vpack.c.b16 %v1033, %v1032
          %v1044 = vpack.c.b16 %v1035, %v1034
          %v1045 = vpack.c.b16 %v1037, %v1036
          %1054 = vmatprep.subr.bf16.mxu0 0
          %1055 = vmatpush1.bf16.msra.mxu0 %v1045
          %1056 = vmatprep.subr.bf16.mxu0 0
          %1057 = vmatpush1.bf16.msra.mxu0 %v1044
          %1058 = vmatprep.subr.bf16.mxu0 0
          %1059 = vmatpush1.bf16.msra.mxu0 %v1043
          %1060 = vmatprep.subr.bf16.mxu0 0
          %1061 = vmatpush1.bf16.msra.mxu0 %v1042
          %1062 = vmatprep.subr.bf16.mxu0 0
          %1063 = vmatpush1.bf16.msra.mxu0 %v1041
          %1064 = vmatprep.subr.bf16.mxu0 0
          %1065 = vmatpush1.bf16.msra.mxu0 %v1040
          %1066 = vmatprep.subr.bf16.mxu0 0
          %1067 = vmatpush1.bf16.msra.mxu0 %v1039
          %1068 = vmatprep.subr.bf16.mxu0 0
          %1069 = vmatpush1.bf16.msra.mxu0 %v1038
          %1070 = vmatprep.subr.bf16.mxu0 0
          %1071 = vmatpush2.bf16.msra.mxu0 0
          %1072 = vmatprep.subr.bf16.mxu0 0
          %1073 = vmatpush2.bf16.msra.mxu0 0
          %1074 = vmatprep.subr.bf16.mxu0 0
          %1075 = vmatpush2.bf16.msra.mxu0 0
          %1076 = vmatprep.subr.bf16.mxu0 0
          %1077 = vmatpush2.bf16.msra.mxu0 0
          %1078 = vmatprep.subr.bf16.mxu0 0
          %1079 = vmatpush2.bf16.msra.mxu0 0
          %1080 = vmatprep.subr.bf16.mxu0 0
          %1081 = vmatpush2.bf16.msra.mxu0 0
          %1082 = vmatprep.subr.bf16.mxu0 0
          %1083 = vmatpush2.bf16.msra.mxu0 0
          %1084 = vmatprep.subr.bf16.mxu0 0
          %1085 = vmatpush2.bf16.msra.mxu0 0
          %1086 = vmatprep.mubr.bf16.mxu0 0
          %1087 = vmatmul.mubr.bf16.gmra.mxu0 %v1002
          %v1088 = vpop.f32.mrf.mxu0
          %v1089 = vadd.f32 %v992, %v1088
          %v1090 = vpop.f32.mrf.mxu0
          %v1091 = vpop.f32.mrf.mxu0
          %v1092 = vadd.f32 %v992, %v1091
          %v1093 = vpop.f32.mrf.mxu0
          %1094 = vmatprep.mubr.bf16.mxu0 0
          %1095 = vmatmul.mubr.bf16.gmra.mxu0 %v1003
          %v1096 = vpop.f32.mrf.mxu0
          %v1097 = vadd.f32 %v992, %v1096
          %v1098 = vpop.f32.mrf.mxu0
          %v1099 = vpop.f32.mrf.mxu0
          %v1100 = vadd.f32 %v992, %v1099
          %v1101 = vpop.f32.mrf.mxu0
          %1102 = vdwg.mxu0
          %v1103 = vmul.f32 %v1089, 0.17677669
          %v1104 = vmul.f32 %v1092, 0.17677669
          %v1105 = vmul.f32 %v1097, 0.17677669
          %v1106 = vmul.f32 %v1100, 0.17677669
          %v1107 = vpack.c.bf16 %v1104, %v1103
          %v1108 = vpack.c.bf16 %v1106, %v1105
          %v1109 = vld [vmem:[#allocation2] sm:$0xff]
          %v1110 = vld [vmem:[#allocation2 + $0x8] sm:$0xff]
          %v1111 = vpack.c.bf16 %v1110, %v1109
          %v1112 = vld [vmem:[#allocation3] sm:$0xff]
          %v1113 = vld [vmem:[#allocation3 + $0x8] sm:$0xff]
          %v1114 = vpack.c.bf16 %v1113, %v1112
          %vm1115 = vcmask 261120
          %v1117 = vsel %vm1115, %v1107, 0
          %v1120 = vsel %vm1115, %v1108, 0
          %v1123 = vsel %vm1115, %v1111, 0
          %1125 = vmatprep.subr.bf16.mxu0 0
          %1126 = vmatpush1.bf16.xpose.msra.mxu0 0
          %1127 = vmatprep.subr.bf16.mxu0 0
          %1128 = vmatpush1.bf16.xpose.msra.mxu0 0
          %1129 = vmatprep.subr.bf16.mxu0 0
          %1130 = vmatpush1.bf16.xpose.msra.mxu0 0
          %1131 = vmatprep.subr.bf16.mxu0 0
          %1132 = vmatpush1.bf16.xpose.msra.mxu0 0
          %1133 = vmatprep.subr.bf16.mxu0 0
          %1134 = vmatpush1.bf16.xpose.msra.mxu0 0
          %1135 = vmatprep.subr.bf16.mxu0 0
          %1136 = vmatpush1.bf16.xpose.msra.mxu0 0
          %1137 = vmatprep.subr.bf16.mxu0 0
          %1138 = vmatpush1.bf16.xpose.msra.mxu0 0
          %1139 = vmatprep.subr.bf16.mxu0 0
          %1140 = vmatpush1.bf16.xpose.msra.mxu0 %v1123
          %1141 = vmatprep.subr.bf16.mxu0 0
          %1142 = vmatpush2.bf16.xpose.msra.mxu0 0
          %1143 = vmatprep.subr.bf16.mxu0 0
          %1144 = vmatpush2.bf16.xpose.msra.mxu0 0
          %1145 = vmatprep.subr.bf16.mxu0 0
          %1146 = vmatpush2.bf16.xpose.msra.mxu0 0
          %1147 = vmatprep.subr.bf16.mxu0 0
          %1148 = vmatpush2.bf16.xpose.msra.mxu0 0
          %1149 = vmatprep.subr.bf16.mxu0 0
          %1150 = vmatpush2.bf16.xpose.msra.mxu0 0
          %1151 = vmatprep.subr.bf16.mxu0 0
          %1152 = vmatpush2.bf16.xpose.msra.mxu0 0
          %1153 = vmatprep.subr.bf16.mxu0 0
          %1154 = vmatpush2.bf16.xpose.msra.mxu0 0
          %1155 = vmatprep.subr.bf16.mxu0 0
          %1156 = vmatpush2.bf16.xpose.msra.mxu0 0
          %1157 = vmatprep.mubr.bf16.mxu0 0
          %1158 = vmatmul.mubr.bf16.gmra.mxu0 %v1117
          %v1159 = vpop.f32.mrf.mxu0
          %v1160 = vadd.f32 0.0, %v1159
          %v1161 = vpop.f32.mrf.mxu0
          %v1162 = vpop.f32.mrf.mxu0
          %v1163 = vadd.f32 0.0, %v1162
          %v1164 = vpop.f32.mrf.mxu0
          %1165 = vmatprep.mubr.bf16.mxu0 0
          %1166 = vmatmul.mubr.bf16.gmra.mxu0 %v1120
          %v1167 = vpop.f32.mrf.mxu0
          %v1168 = vadd.f32 0.0, %v1167
          %v1169 = vpop.f32.mrf.mxu0
          %v1170 = vpop.f32.mrf.mxu0
          %v1171 = vadd.f32 0.0, %v1170
          %v1172 = vpop.f32.mrf.mxu0
          %1173 = vdwg.mxu0
          %vm1174 = vcmask 130048
          %v1175 = vsel %vm1174, %v1160, -inf
          %1176 = vmax.xlane.f32.xlu0 %v1175
          %v1177 = vpop.xlane.xlu0 %1176
          %v1178 = vsel %vm1174, %v1163, -inf
          %1179 = vmax.xlane.f32.xlu0 %v1178
          %v1180 = vpop.xlane.xlu0 %1179
          %v1181 = vsel %vm1174, %v1168, -inf
          %1182 = vmax.xlane.f32.xlu0 %v1181
          %v1183 = vpop.xlane.xlu0 %1182
          %v1184 = vsel %vm1174, %v1171, -inf
          %1185 = vmax.xlane.f32.xlu0 %v1184
          %v1186 = vpop.xlane.xlu0 %1185
          %v1187 = vsub.f32 %v1160, %v1177
          %v1188 = vsub.f32 %v1163, %v1180
          %v1189 = vsub.f32 %v1168, %v1183
          %v1190 = vsub.f32 %v1171, %v1186
          %v1191 = vmul.f32 %v1187, 1.442695
          %v1192 = vpow.pop %v1191
          %v1193 = vmul.f32 %v1188, 1.442695
          %v1194 = vpow.pop %v1193
          %v1195 = vmul.f32 %v1189, 1.442695
          %v1196 = vpow.pop %v1195
          %v1197 = vmul.f32 %v1190, 1.442695
          %v1198 = vpow.pop %v1197
          %v1199 = vsel %vm1174, %v1192, 0.0
          %1200 = vadd.xlane.f32.xlu0 %v1199
          %v1201 = vpop.xlane.xlu0 %1200
          %v1202 = vsel %vm1174, %v1194, 0.0
          %1203 = vadd.xlane.f32.xlu0 %v1202
          %v1204 = vpop.xlane.xlu0 %1203
          %v1205 = vsel %vm1174, %v1196, 0.0
          %1206 = vadd.xlane.f32.xlu0 %v1205
          %v1207 = vpop.xlane.xlu0 %1206
          %v1208 = vsel %vm1174, %v1198, 0.0
          %1209 = vadd.xlane.f32.xlu0 %v1208
          %v1210 = vpop.xlane.xlu0 %1209
          %v1211 = vrcp.pop %v1201
          %v1212 = vrcp.pop %v1204
          %v1213 = vrcp.pop %v1207
          %v1214 = vrcp.pop %v1210
          %v1215 = vmul.f32 %v1192, %v1211
          %v1216 = vmul.f32 %v1194, %v1212
          %v1217 = vmul.f32 %v1196, %v1213
          %v1218 = vmul.f32 %v1198, %v1214
          %v1219 = vpack.c.bf16 %v1216, %v1215
          %v1220 = vpack.c.bf16 %v1218, %v1217
          %v1222 = vsel %vm1174, %v1219, 0
          %v1225 = vsel %vm1174, %v1220, 0
          %1227 = vmatprep.subr.bf16.mxu0 0
          %1228 = vmatpush1.bf16.msra.mxu0 0
          %1229 = vmatprep.subr.bf16.mxu0 0
          %1230 = vmatpush1.bf16.msra.mxu0 0
          %1231 = vmatprep.subr.bf16.mxu0 0
          %1232 = vmatpush1.bf16.msra.mxu0 0
          %1233 = vmatprep.subr.bf16.mxu0 0
          %1234 = vmatpush1.bf16.msra.mxu0 0
          %1235 = vmatprep.subr.bf16.mxu0 0
          %1236 = vmatpush1.bf16.msra.mxu0 0
          %1237 = vmatprep.subr.bf16.mxu0 0
          %1238 = vmatpush1.bf16.msra.mxu0 0
          %1239 = vmatprep.subr.bf16.mxu0 0
          %1240 = vmatpush1.bf16.msra.mxu0 0
          %1241 = vmatprep.subr.bf16.mxu0 0
          %1242 = vmatpush1.bf16.msra.mxu0 %v1114
          %1243 = vmatprep.subr.bf16.mxu0 0
          %1244 = vmatpush2.bf16.msra.mxu0 0
          %1245 = vmatprep.subr.bf16.mxu0 0
          %1246 = vmatpush2.bf16.msra.mxu0 0
          %1247 = vmatprep.subr.bf16.mxu0 0
          %1248 = vmatpush2.bf16.msra.mxu0 0
          %1249 = vmatprep.subr.bf16.mxu0 0
          %1250 = vmatpush2.bf16.msra.mxu0 0
          %1251 = vmatprep.subr.bf16.mxu0 0
          %1252 = vmatpush2.bf16.msra.mxu0 0
          %1253 = vmatprep.subr.bf16.mxu0 0
          %1254 = vmatpush2.bf16.msra.mxu0 0
          %1255 = vmatprep.subr.bf16.mxu0 0
          %1256 = vmatpush2.bf16.msra.mxu0 0
          %1257 = vmatprep.subr.bf16.mxu0 0
          %1258 = vmatpush2.bf16.msra.mxu0 0
          %1259 = vmatprep.mubr.bf16.mxu0 0
          %1260 = vmatmul.mubr.bf16.gmra.mxu0 %v1222
          %v1261 = vpop.f32.mrf.mxu0
          %v1262 = vadd.f32 0.0, %v1261
          %v1263 = vpop.f32.mrf.mxu0
          %v1264 = vpop.f32.mrf.mxu0
          %v1265 = vadd.f32 0.0, %v1264
          %v1266 = vpop.f32.mrf.mxu0
          %1267 = vmatprep.mubr.bf16.mxu0 0
          %1268 = vmatmul.mubr.bf16.gmra.mxu0 %v1225
          %v1269 = vpop.f32.mrf.mxu0
          %v1270 = vadd.f32 0.0, %v1269
          %v1271 = vpop.f32.mrf.mxu0
          %v1272 = vpop.f32.mrf.mxu0
          %v1273 = vadd.f32 0.0, %v1272
          %v1274 = vpop.f32.mrf.mxu0
          %1275 = vdwg.mxu0
          %1278 = vrot.lane.b32.xlu0 %v1107, 96
          %v1279 = vpop.permute.xlu0 %1278
          %1280 = vrot.lane.b32.xlu0 %v1108, 96
          %v1281 = vpop.permute.xlu0 %1280
          %1283 = vrot.lane.b32.xlu0 %v1111, 96
          %v1284 = vpop.permute.xlu0 %1283
          %v1286 = vsel %vm1115, %v1279, 0
          %v1289 = vsel %vm1115, %v1281, 0
          %v1292 = vsel %vm1115, %v1284, 0
          %1294 = vmatprep.subr.bf16.mxu0 0
          %1295 = vmatpush1.bf16.xpose.msra.mxu0 0
          %1296 = vmatprep.subr.bf16.mxu0 0
          %1297 = vmatpush1.bf16.xpose.msra.mxu0 0
          %1298 = vmatprep.subr.bf16.mxu0 0
          %1299 = vmatpush1.bf16.xpose.msra.mxu0 0
          %1300 = vmatprep.subr.bf16.mxu0 0
          %1301 = vmatpush1.bf16.xpose.msra.mxu0 0
          %1302 = vmatprep.subr.bf16.mxu0 0
          %1303 = vmatpush1.bf16.xpose.msra.mxu0 0
          %1304 = vmatprep.subr.bf16.mxu0 0
          %1305 = vmatpush1.bf16.xpose.msra.mxu0 0
          %1306 = vmatprep.subr.bf16.mxu0 0
          %1307 = vmatpush1.bf16.xpose.msra.mxu0 0
          %1308 = vmatprep.subr.bf16.mxu0 0
          %1309 = vmatpush1.bf16.xpose.msra.mxu0 %v1292
          %1310 = vmatprep.subr.bf16.mxu0 0
          %1311 = vmatpush2.bf16.xpose.msra.mxu0 0
          %1312 = vmatprep.subr.bf16.mxu0 0
          %1313 = vmatpush2.bf16.xpose.msra.mxu0 0
          %1314 = vmatprep.subr.bf16.mxu0 0
          %1315 = vmatpush2.bf16.xpose.msra.mxu0 0
          %1316 = vmatprep.subr.bf16.mxu0 0
          %1317 = vmatpush2.bf16.xpose.msra.mxu0 0
          %1318 = vmatprep.subr.bf16.mxu0 0
          %1319 = vmatpush2.bf16.xpose.msra.mxu0 0
          %1320 = vmatprep.subr.bf16.mxu0 0
          %1321 = vmatpush2.bf16.xpose.msra.mxu0 0
          %1322 = vmatprep.subr.bf16.mxu0 0
          %1323 = vmatpush2.bf16.xpose.msra.mxu0 0
          %1324 = vmatprep.subr.bf16.mxu0 0
          %1325 = vmatpush2.bf16.xpose.msra.mxu0 0
          %1326 = vmatprep.mubr.bf16.mxu0 0
          %1327 = vmatmul.mubr.bf16.gmra.mxu0 %v1286
          %v1328 = vpop.f32.mrf.mxu0
          %v1329 = vadd.f32 0.0, %v1328
          %v1330 = vpop.f32.mrf.mxu0
          %v1331 = vpop.f32.mrf.mxu0
          %v1332 = vadd.f32 0.0, %v1331
          %v1333 = vpop.f32.mrf.mxu0
          %1334 = vmatprep.mubr.bf16.mxu0 0
          %1335 = vmatmul.mubr.bf16.gmra.mxu0 %v1289
          %v1336 = vpop.f32.mrf.mxu0
          %v1337 = vadd.f32 0.0, %v1336
          %v1338 = vpop.f32.mrf.mxu0
          %v1339 = vpop.f32.mrf.mxu0
          %v1340 = vadd.f32 0.0, %v1339
          %v1341 = vpop.f32.mrf.mxu0
          %1342 = vdwg.mxu0
          %v1343 = vsel %vm1174, %v1329, -inf
          %1344 = vmax.xlane.f32.xlu0 %v1343
          %v1345 = vpop.xlane.xlu0 %1344
          %v1346 = vsel %vm1174, %v1332, -inf
          %1347 = vmax.xlane.f32.xlu0 %v1346
          %v1348 = vpop.xlane.xlu0 %1347
          %v1349 = vsel %vm1174, %v1337, -inf
          %1350 = vmax.xlane.f32.xlu0 %v1349
          %v1351 = vpop.xlane.xlu0 %1350
          %v1352 = vsel %vm1174, %v1340, -inf
          %1353 = vmax.xlane.f32.xlu0 %v1352
          %v1354 = vpop.xlane.xlu0 %1353
          %v1355 = vsub.f32 %v1329, %v1345
          %v1356 = vsub.f32 %v1332, %v1348
          %v1357 = vsub.f32 %v1337, %v1351
          %v1358 = vsub.f32 %v1340, %v1354
          %v1359 = vmul.f32 %v1355, 1.442695
          %v1360 = vpow.pop %v1359
          %v1361 = vmul.f32 %v1356, 1.442695
          %v1362 = vpow.pop %v1361
          %v1363 = vmul.f32 %v1357, 1.442695
          %v1364 = vpow.pop %v1363
          %v1365 = vmul.f32 %v1358, 1.442695
          %v1366 = vpow.pop %v1365
          %v1367 = vsel %vm1174, %v1360, 0.0
          %1368 = vadd.xlane.f32.xlu0 %v1367
          %v1369 = vpop.xlane.xlu0 %1368
          %v1370 = vsel %vm1174, %v1362, 0.0
          %1371 = vadd.xlane.f32.xlu0 %v1370
          %v1372 = vpop.xlane.xlu0 %1371
          %v1373 = vsel %vm1174, %v1364, 0.0
          %1374 = vadd.xlane.f32.xlu0 %v1373
          %v1375 = vpop.xlane.xlu0 %1374
          %v1376 = vsel %vm1174, %v1366, 0.0
          %1377 = vadd.xlane.f32.xlu0 %v1376
          %v1378 = vpop.xlane.xlu0 %1377
          %v1379 = vrcp.pop %v1369
          %v1380 = vrcp.pop %v1372
          %v1381 = vrcp.pop %v1375
          %v1382 = vrcp.pop %v1378
          %v1383 = vmul.f32 %v1360, %v1379
          %v1384 = vmul.f32 %v1362, %v1380
          %v1385 = vmul.f32 %v1364, %v1381
          %v1386 = vmul.f32 %v1366, %v1382
          %v1387 = vpack.c.bf16 %v1384, %v1383
          %v1388 = vpack.c.bf16 %v1386, %v1385
          %1390 = vrot.lane.b32.xlu0 %v1114, 96
          %v1391 = vpop.permute.xlu0 %1390
          %v1394 = vsel %vm1174, %v1387, 0
          %v1397 = vsel %vm1174, %v1388, 0
          %1399 = vmatprep.subr.bf16.mxu0 0
          %1400 = vmatpush1.bf16.msra.mxu0 0
          %1401 = vmatprep.subr.bf16.mxu0 0
          %1402 = vmatpush1.bf16.msra.mxu0 0
          %1403 = vmatprep.subr.bf16.mxu0 0
          %1404 = vmatpush1.bf16.msra.mxu0 0
          %1405 = vmatprep.subr.bf16.mxu0 0
          %1406 = vmatpush1.bf16.msra.mxu0 0
          %1407 = vmatprep.subr.bf16.mxu0 0
          %1408 = vmatpush1.bf16.msra.mxu0 0
          %1409 = vmatprep.subr.bf16.mxu0 0
          %1410 = vmatpush1.bf16.msra.mxu0 0
          %1411 = vmatprep.subr.bf16.mxu0 0
          %1412 = vmatpush1.bf16.msra.mxu0 0
          %1413 = vmatprep.subr.bf16.mxu0 0
          %1414 = vmatpush1.bf16.msra.mxu0 %v1391
          %1415 = vmatprep.subr.bf16.mxu0 0
          %1416 = vmatpush2.bf16.msra.mxu0 0
          %1417 = vmatprep.subr.bf16.mxu0 0
          %1418 = vmatpush2.bf16.msra.mxu0 0
          %1419 = vmatprep.subr.bf16.mxu0 0
          %1420 = vmatpush2.bf16.msra.mxu0 0
          %1421 = vmatprep.subr.bf16.mxu0 0
          %1422 = vmatpush2.bf16.msra.mxu0 0
          %1423 = vmatprep.subr.bf16.mxu0 0
          %1424 = vmatpush2.bf16.msra.mxu0 0
          %1425 = vmatprep.subr.bf16.mxu0 0
          %1426 = vmatpush2.bf16.msra.mxu0 0
          %1427 = vmatprep.subr.bf16.mxu0 0
          %1428 = vmatpush2.bf16.msra.mxu0 0
          %1429 = vmatprep.subr.bf16.mxu0 0
          %1430 = vmatpush2.bf16.msra.mxu0 0
          %1431 = vmatprep.mubr.bf16.mxu0 0
          %1432 = vmatmul.mubr.bf16.gmra.mxu0 %v1394
          %v1433 = vpop.f32.mrf.mxu0
          %v1434 = vadd.f32 0.0, %v1433
          %v1435 = vpop.f32.mrf.mxu0
          %v1436 = vpop.f32.mrf.mxu0
          %v1437 = vadd.f32 0.0, %v1436
          %v1438 = vpop.f32.mrf.mxu0
          %1439 = vmatprep.mubr.bf16.mxu0 0
          %1440 = vmatmul.mubr.bf16.gmra.mxu0 %v1397
          %v1441 = vpop.f32.mrf.mxu0
          %v1442 = vadd.f32 0.0, %v1441
          %v1443 = vpop.f32.mrf.mxu0
          %v1444 = vpop.f32.mrf.mxu0
          %v1445 = vadd.f32 0.0, %v1444
          %v1446 = vpop.f32.mrf.mxu0
          %1447 = vdwg.mxu0
          %1448 = vrot.lane.b32.xlu0 %v1107, 64
          %v1449 = vpop.permute.xlu0 %1448
          %1450 = vrot.lane.b32.xlu0 %v1108, 64
          %v1451 = vpop.permute.xlu0 %1450
          %1452 = vrot.lane.b32.xlu0 %v1111, 64
          %v1453 = vpop.permute.xlu0 %1452
          %v1455 = vsel %vm1115, %v1449, 0
          %v1458 = vsel %vm1115, %v1451, 0
          %v1461 = vsel %vm1115, %v1453, 0
          %1463 = vmatprep.subr.bf16.mxu0 0
          %1464 = vmatpush1.bf16.xpose.msra.mxu0 0
          %1465 = vmatprep.subr.bf16.mxu0 0
          %1466 = vmatpush1.bf16.xpose.msra.mxu0 0
          %1467 = vmatprep.subr.bf16.mxu0 0
          %1468 = vmatpush1.bf16.xpose.msra.mxu0 0
          %1469 = vmatprep.subr.bf16.mxu0 0
          %1470 = vmatpush1.bf16.xpose.msra.mxu0 0
          %1471 = vmatprep.subr.bf16.mxu0 0
          %1472 = vmatpush1.bf16.xpose.msra.mxu0 0
          %1473 = vmatprep.subr.bf16.mxu0 0
          %1474 = vmatpush1.bf16.xpose.msra.mxu0 0
          %1475 = vmatprep.subr.bf16.mxu0 0
          %1476 = vmatpush1.bf16.xpose.msra.mxu0 0
          %1477 = vmatprep.subr.bf16.mxu0 0
          %1478 = vmatpush1.bf16.xpose.msra.mxu0 %v1461
          %1479 = vmatprep.subr.bf16.mxu0 0
          %1480 = vmatpush2.bf16.xpose.msra.mxu0 0
          %1481 = vmatprep.subr.bf16.mxu0 0
          %1482 = vmatpush2.bf16.xpose.msra.mxu0 0
          %1483 = vmatprep.subr.bf16.mxu0 0
          %1484 = vmatpush2.bf16.xpose.msra.mxu0 0
          %1485 = vmatprep.subr.bf16.mxu0 0
          %1486 = vmatpush2.bf16.xpose.msra.mxu0 0
          %1487 = vmatprep.subr.bf16.mxu0 0
          %1488 = vmatpush2.bf16.xpose.msra.mxu0 0
          %1489 = vmatprep.subr.bf16.mxu0 0
          %1490 = vmatpush2.bf16.xpose.msra.mxu0 0
          %1491 = vmatprep.subr.bf16.mxu0 0
          %1492 = vmatpush2.bf16.xpose.msra.mxu0 0
          %1493 = vmatprep.subr.bf16.mxu0 0
          %1494 = vmatpush2.bf16.xpose.msra.mxu0 0
          %1495 = vmatprep.mubr.bf16.mxu0 0
          %1496 = vmatmul.mubr.bf16.gmra.mxu0 %v1455
          %v1497 = vpop.f32.mrf.mxu0
          %v1498 = vadd.f32 0.0, %v1497
          %v1499 = vpop.f32.mrf.mxu0
          %v1500 = vpop.f32.mrf.mxu0
          %v1501 = vadd.f32 0.0, %v1500
          %v1502 = vpop.f32.mrf.mxu0
          %1503 = vmatprep.mubr.bf16.mxu0 0
          %1504 = vmatmul.mubr.bf16.gmra.mxu0 %v1458
          %v1505 = vpop.f32.mrf.mxu0
          %v1506 = vadd.f32 0.0, %v1505
          %v1507 = vpop.f32.mrf.mxu0
          %v1508 = vpop.f32.mrf.mxu0
          %v1509 = vadd.f32 0.0, %v1508
          %v1510 = vpop.f32.mrf.mxu0
          %1511 = vdwg.mxu0
          %v1512 = vsel %vm1174, %v1498, -inf
          %1513 = vmax.xlane.f32.xlu0 %v1512
          %v1514 = vpop.xlane.xlu0 %1513
          %v1515 = vsel %vm1174, %v1501, -inf
          %1516 = vmax.xlane.f32.xlu0 %v1515
          %v1517 = vpop.xlane.xlu0 %1516
          %v1518 = vsel %vm1174, %v1506, -inf
          %1519 = vmax.xlane.f32.xlu0 %v1518
          %v1520 = vpop.xlane.xlu0 %1519
          %v1521 = vsel %vm1174, %v1509, -inf
          %1522 = vmax.xlane.f32.xlu0 %v1521
          %v1523 = vpop.xlane.xlu0 %1522
          %v1524 = vsub.f32 %v1498, %v1514
          %v1525 = vsub.f32 %v1501, %v1517
          %v1526 = vsub.f32 %v1506, %v1520
          %v1527 = vsub.f32 %v1509, %v1523
          %v1528 = vmul.f32 %v1524, 1.442695
          %v1529 = vpow.pop %v1528
          %v1530 = vmul.f32 %v1525, 1.442695
          %v1531 = vpow.pop %v1530
          %v1532 = vmul.f32 %v1526, 1.442695
          %v1533 = vpow.pop %v1532
          %v1534 = vmul.f32 %v1527, 1.442695
          %v1535 = vpow.pop %v1534
          %v1536 = vsel %vm1174, %v1529, 0.0
          %1537 = vadd.xlane.f32.xlu0 %v1536
          %v1538 = vpop.xlane.xlu0 %1537
          %v1539 = vsel %vm1174, %v1531, 0.0
          %1540 = vadd.xlane.f32.xlu0 %v1539
          %v1541 = vpop.xlane.xlu0 %1540
          %v1542 = vsel %vm1174, %v1533, 0.0
          %1543 = vadd.xlane.f32.xlu0 %v1542
          %v1544 = vpop.xlane.xlu0 %1543
          %v1545 = vsel %vm1174, %v1535, 0.0
          %1546 = vadd.xlane.f32.xlu0 %v1545
          %v1547 = vpop.xlane.xlu0 %1546
          %v1548 = vrcp.pop %v1538
          %v1549 = vrcp.pop %v1541
          %v1550 = vrcp.pop %v1544
          %v1551 = vrcp.pop %v1547
          %v1552 = vmul.f32 %v1529, %v1548
          %v1553 = vmul.f32 %v1531, %v1549
          %v1554 = vmul.f32 %v1533, %v1550
          %v1555 = vmul.f32 %v1535, %v1551
          %v1556 = vpack.c.bf16 %v1553, %v1552
          %v1557 = vpack.c.bf16 %v1555, %v1554
          %1558 = vrot.lane.b32.xlu0 %v1114, 64
          %v1559 = vpop.permute.xlu0 %1558
          %v1562 = vsel %vm1174, %v1556, 0
          %v1565 = vsel %vm1174, %v1557, 0
          %1567 = vmatprep.subr.bf16.mxu0 0
          %1568 = vmatpush1.bf16.msra.mxu0 0
          %1569 = vmatprep.subr.bf16.mxu0 0
          %1570 = vmatpush1.bf16.msra.mxu0 0
          %1571 = vmatprep.subr.bf16.mxu0 0
          %1572 = vmatpush1.bf16.msra.mxu0 0
          %1573 = vmatprep.subr.bf16.mxu0 0
          %1574 = vmatpush1.bf16.msra.mxu0 0
          %1575 = vmatprep.subr.bf16.mxu0 0
          %1576 = vmatpush1.bf16.msra.mxu0 0
          %1577 = vmatprep.subr.bf16.mxu0 0
          %1578 = vmatpush1.bf16.msra.mxu0 0
          %1579 = vmatprep.subr.bf16.mxu0 0
          %1580 = vmatpush1.bf16.msra.mxu0 0
          %1581 = vmatprep.subr.bf16.mxu0 0
          %1582 = vmatpush1.bf16.msra.mxu0 %v1559
          %1583 = vmatprep.subr.bf16.mxu0 0
          %1584 = vmatpush2.bf16.msra.mxu0 0
          %1585 = vmatprep.subr.bf16.mxu0 0
          %1586 = vmatpush2.bf16.msra.mxu0 0
          %1587 = vmatprep.subr.bf16.mxu0 0
          %1588 = vmatpush2.bf16.msra.mxu0 0
          %1589 = vmatprep.subr.bf16.mxu0 0
          %1590 = vmatpush2.bf16.msra.mxu0 0
          %1591 = vmatprep.subr.bf16.mxu0 0
          %1592 = vmatpush2.bf16.msra.mxu0 0
          %1593 = vmatprep.subr.bf16.mxu0 0
          %1594 = vmatpush2.bf16.msra.mxu0 0
          %1595 = vmatprep.subr.bf16.mxu0 0
          %1596 = vmatpush2.bf16.msra.mxu0 0
          %1597 = vmatprep.subr.bf16.mxu0 0
          %1598 = vmatpush2.bf16.msra.mxu0 0
          %1599 = vmatprep.mubr.bf16.mxu0 0
          %1600 = vmatmul.mubr.bf16.gmra.mxu0 %v1562
          %v1601 = vpop.f32.mrf.mxu0
          %v1602 = vadd.f32 0.0, %v1601
          %v1603 = vpop.f32.mrf.mxu0
          %v1604 = vpop.f32.mrf.mxu0
          %v1605 = vadd.f32 0.0, %v1604
          %v1606 = vpop.f32.mrf.mxu0
          %1607 = vmatprep.mubr.bf16.mxu0 0
          %1608 = vmatmul.mubr.bf16.gmra.mxu0 %v1565
          %v1609 = vpop.f32.mrf.mxu0
          %v1610 = vadd.f32 0.0, %v1609
          %v1611 = vpop.f32.mrf.mxu0
          %v1612 = vpop.f32.mrf.mxu0
          %v1613 = vadd.f32 0.0, %v1612
          %v1614 = vpop.f32.mrf.mxu0
          %1615 = vdwg.mxu0
          %1616 = vrot.lane.b32.xlu0 %v1107, 32
          %v1617 = vpop.permute.xlu0 %1616
          %1618 = vrot.lane.b32.xlu0 %v1108, 32
          %v1619 = vpop.permute.xlu0 %1618
          %1620 = vrot.lane.b32.xlu0 %v1111, 32
          %v1621 = vpop.permute.xlu0 %1620
          %v1623 = vsel %vm1115, %v1617, 0
          %v1626 = vsel %vm1115, %v1619, 0
          %v1629 = vsel %vm1115, %v1621, 0
          %1631 = vmatprep.subr.bf16.mxu0 0
          %1632 = vmatpush1.bf16.xpose.msra.mxu0 0
          %1633 = vmatprep.subr.bf16.mxu0 0
          %1634 = vmatpush1.bf16.xpose.msra.mxu0 0
          %1635 = vmatprep.subr.bf16.mxu0 0
          %1636 = vmatpush1.bf16.xpose.msra.mxu0 0
          %1637 = vmatprep.subr.bf16.mxu0 0
          %1638 = vmatpush1.bf16.xpose.msra.mxu0 0
          %1639 = vmatprep.subr.bf16.mxu0 0
          %1640 = vmatpush1.bf16.xpose.msra.mxu0 0
          %1641 = vmatprep.subr.bf16.mxu0 0
          %1642 = vmatpush1.bf16.xpose.msra.mxu0 0
          %1643 = vmatprep.subr.bf16.mxu0 0
          %1644 = vmatpush1.bf16.xpose.msra.mxu0 0
          %1645 = vmatprep.subr.bf16.mxu0 0
          %1646 = vmatpush1.bf16.xpose.msra.mxu0 %v1629
          %1647 = vmatprep.subr.bf16.mxu0 0
          %1648 = vmatpush2.bf16.xpose.msra.mxu0 0
          %1649 = vmatprep.subr.bf16.mxu0 0
          %1650 = vmatpush2.bf16.xpose.msra.mxu0 0
          %1651 = vmatprep.subr.bf16.mxu0 0
          %1652 = vmatpush2.bf16.xpose.msra.mxu0 0
          %1653 = vmatprep.subr.bf16.mxu0 0
          %1654 = vmatpush2.bf16.xpose.msra.mxu0 0
          %1655 = vmatprep.subr.bf16.mxu0 0
          %1656 = vmatpush2.bf16.xpose.msra.mxu0 0
          %1657 = vmatprep.subr.bf16.mxu0 0
          %1658 = vmatpush2.bf16.xpose.msra.mxu0 0
          %1659 = vmatprep.subr.bf16.mxu0 0
          %1660 = vmatpush2.bf16.xpose.msra.mxu0 0
          %1661 = vmatprep.subr.bf16.mxu0 0
          %1662 = vmatpush2.bf16.xpose.msra.mxu0 0
          %1663 = vmatprep.mubr.bf16.mxu0 0
          %1664 = vmatmul.mubr.bf16.gmra.mxu0 %v1623
          %v1665 = vpop.f32.mrf.mxu0
          %v1666 = vadd.f32 0.0, %v1665
          %v1667 = vpop.f32.mrf.mxu0
          %v1668 = vpop.f32.mrf.mxu0
          %v1669 = vadd.f32 0.0, %v1668
          %v1670 = vpop.f32.mrf.mxu0
          %1671 = vmatprep.mubr.bf16.mxu0 0
          %1672 = vmatmul.mubr.bf16.gmra.mxu0 %v1626
          %v1673 = vpop.f32.mrf.mxu0
          %v1674 = vadd.f32 0.0, %v1673
          %v1675 = vpop.f32.mrf.mxu0
          %v1676 = vpop.f32.mrf.mxu0
          %v1677 = vadd.f32 0.0, %v1676
          %v1678 = vpop.f32.mrf.mxu0
          %1679 = vdwg.mxu0
          %v1680 = vsel %vm1174, %v1666, -inf
          %1681 = vmax.xlane.f32.xlu0 %v1680
          %v1682 = vpop.xlane.xlu0 %1681
          %v1683 = vsel %vm1174, %v1669, -inf
          %1684 = vmax.xlane.f32.xlu0 %v1683
          %v1685 = vpop.xlane.xlu0 %1684
          %v1686 = vsel %vm1174, %v1674, -inf
          %1687 = vmax.xlane.f32.xlu0 %v1686
          %v1688 = vpop.xlane.xlu0 %1687
          %v1689 = vsel %vm1174, %v1677, -inf
          %1690 = vmax.xlane.f32.xlu0 %v1689
          %v1691 = vpop.xlane.xlu0 %1690
          %v1692 = vsub.f32 %v1666, %v1682
          %v1693 = vsub.f32 %v1669, %v1685
          %v1694 = vsub.f32 %v1674, %v1688
          %v1695 = vsub.f32 %v1677, %v1691
          %v1696 = vmul.f32 %v1692, 1.442695
          %v1697 = vpow.pop %v1696
          %v1698 = vmul.f32 %v1693, 1.442695
          %v1699 = vpow.pop %v1698
          %v1700 = vmul.f32 %v1694, 1.442695
          %v1701 = vpow.pop %v1700
          %v1702 = vmul.f32 %v1695, 1.442695
          %v1703 = vpow.pop %v1702
          %v1704 = vsel %vm1174, %v1697, 0.0
          %1705 = vadd.xlane.f32.xlu0 %v1704
          %v1706 = vpop.xlane.xlu0 %1705
          %v1707 = vsel %vm1174, %v1699, 0.0
          %1708 = vadd.xlane.f32.xlu0 %v1707
          %v1709 = vpop.xlane.xlu0 %1708
          %v1710 = vsel %vm1174, %v1701, 0.0
          %1711 = vadd.xlane.f32.xlu0 %v1710
          %v1712 = vpop.xlane.xlu0 %1711
          %v1713 = vsel %vm1174, %v1703, 0.0
          %1714 = vadd.xlane.f32.xlu0 %v1713
          %v1715 = vpop.xlane.xlu0 %1714
          %v1716 = vrcp.pop %v1706
          %v1717 = vrcp.pop %v1709
          %v1718 = vrcp.pop %v1712
          %v1719 = vrcp.pop %v1715
          %v1720 = vmul.f32 %v1697, %v1716
          %v1721 = vmul.f32 %v1699, %v1717
          %v1722 = vmul.f32 %v1701, %v1718
          %v1723 = vmul.f32 %v1703, %v1719
          %v1724 = vpack.c.bf16 %v1721, %v1720
          %v1725 = vpack.c.bf16 %v1723, %v1722
          %1726 = vrot.lane.b32.xlu0 %v1114, 32
          %v1727 = vpop.permute.xlu0 %1726
          %v1730 = vsel %vm1174, %v1724, 0
          %v1733 = vsel %vm1174, %v1725, 0
          %1735 = vmatprep.subr.bf16.mxu0 0
          %1736 = vmatpush1.bf16.msra.mxu0 0
          %1737 = vmatprep.subr.bf16.mxu0 0
          %1738 = vmatpush1.bf16.msra.mxu0 0
          %1739 = vmatprep.subr.bf16.mxu0 0
          %1740 = vmatpush1.bf16.msra.mxu0 0
          %1741 = vmatprep.subr.bf16.mxu0 0
          %1742 = vmatpush1.bf16.msra.mxu0 0
          %1743 = vmatprep.subr.bf16.mxu0 0
          %1744 = vmatpush1.bf16.msra.mxu0 0
          %1745 = vmatprep.subr.bf16.mxu0 0
          %1746 = vmatpush1.bf16.msra.mxu0 0
          %1747 = vmatprep.subr.bf16.mxu0 0
          %1748 = vmatpush1.bf16.msra.mxu0 0
          %1749 = vmatprep.subr.bf16.mxu0 0
          %1750 = vmatpush1.bf16.msra.mxu0 %v1727
          %1751 = vmatprep.subr.bf16.mxu0 0
          %1752 = vmatpush2.bf16.msra.mxu0 0
          %1753 = vmatprep.subr.bf16.mxu0 0
          %1754 = vmatpush2.bf16.msra.mxu0 0
          %1755 = vmatprep.subr.bf16.mxu0 0
          %1756 = vmatpush2.bf16.msra.mxu0 0
          %1757 = vmatprep.subr.bf16.mxu0 0
          %1758 = vmatpush2.bf16.msra.mxu0 0
          %1759 = vmatprep.subr.bf16.mxu0 0
          %1760 = vmatpush2.bf16.msra.mxu0 0
          %1761 = vmatprep.subr.bf16.mxu0 0
          %1762 = vmatpush2.bf16.msra.mxu0 0
          %1763 = vmatprep.subr.bf16.mxu0 0
          %1764 = vmatpush2.bf16.msra.mxu0 0
          %1765 = vmatprep.subr.bf16.mxu0 0
          %1766 = vmatpush2.bf16.msra.mxu0 0
          %1767 = vmatprep.mubr.bf16.mxu0 0
          %1768 = vmatmul.mubr.bf16.gmra.mxu0 %v1730
          %v1769 = vpop.f32.mrf.mxu0
          %v1770 = vadd.f32 0.0, %v1769
          %v1771 = vpop.f32.mrf.mxu0
          %v1772 = vpop.f32.mrf.mxu0
          %v1773 = vadd.f32 0.0, %v1772
          %v1774 = vpop.f32.mrf.mxu0
          %1775 = vmatprep.mubr.bf16.mxu0 0
          %1776 = vmatmul.mubr.bf16.gmra.mxu0 %v1733
          %v1777 = vpop.f32.mrf.mxu0
          %v1778 = vadd.f32 0.0, %v1777
          %v1779 = vpop.f32.mrf.mxu0
          %v1780 = vpop.f32.mrf.mxu0
          %v1781 = vadd.f32 0.0, %v1780
          %v1782 = vpop.f32.mrf.mxu0
          %1783 = vdwg.mxu0
          %1788 = vrot.lane.b32.xlu0 %v1434, 32
          %v1789 = vpop.permute.xlu0 %1788
          %1790 = vrot.lane.b32.xlu0 %v1437, 32
          %v1791 = vpop.permute.xlu0 %1790
          %1792 = vrot.lane.b32.xlu0 %v1442, 32
          %v1793 = vpop.permute.xlu0 %1792
          %1794 = vrot.lane.b32.xlu0 %v1445, 32
          %v1795 = vpop.permute.xlu0 %1794
          %1804 = vrot.lane.b32.xlu0 %v1602, 64
          %v1805 = vpop.permute.xlu0 %1804
          %1806 = vrot.lane.b32.xlu0 %v1605, 64
          %v1807 = vpop.permute.xlu0 %1806
          %1808 = vrot.lane.b32.xlu0 %v1610, 64
          %v1809 = vpop.permute.xlu0 %1808
          %1810 = vrot.lane.b32.xlu0 %v1613, 64
          %v1811 = vpop.permute.xlu0 %1810
          %1820 = vrot.lane.b32.xlu0 %v1770, 96
          %v1821 = vpop.permute.xlu0 %1820
          %1822 = vrot.lane.b32.xlu0 %v1773, 96
          %v1823 = vpop.permute.xlu0 %1822
          %1824 = vrot.lane.b32.xlu0 %v1778, 96
          %v1825 = vpop.permute.xlu0 %1824
          %1826 = vrot.lane.b32.xlu0 %v1781, 96
          %v1827 = vpop.permute.xlu0 %1826
          %v1832 = vsel %vm1115, %v1262, %v1789
          %v1833 = vsel %vm1115, %v1265, %v1791
          %v1834 = vsel %vm1115, %v1270, %v1793
          %v1835 = vsel %vm1115, %v1273, %v1795
          %vm1836 = vcmask 523264
          %v1837 = vsel %vm1836, %v1832, %v1805
          %v1838 = vsel %vm1836, %v1833, %v1807
          %v1839 = vsel %vm1836, %v1834, %v1809
          %v1840 = vsel %vm1836, %v1835, %v1811
          %vm1841 = vcmask 785408
          %v1842 = vsel %vm1841, %v1837, %v1821
          %v1843 = vsel %vm1841, %v1838, %v1823
          %v1844 = vsel %vm1841, %v1839, %v1825
          %v1845 = vsel %vm1841, %v1840, %v1827
          %v1846 = vpack.c.bf16 %v1843, %v1842
          %v1847 = vpack.c.bf16 %v1845, %v1844
          %v1848 = vld [vmem:[#allocation10] sm:$0xf]
          %v1849 = vld [vmem:[#allocation10 + $0x4] sm:$0xf]
          %v1850 = vld [vmem:[#allocation10 + $0x8] sm:$0xf]
          %v1851 = vld [vmem:[#allocation10 + $0xc] sm:$0xf]
          %v1852 = vld [vmem:[#allocation10 + $0x10] sm:$0xf]
          %v1853 = vld [vmem:[#allocation10 + $0x14] sm:$0xf]
          %v1854 = vld [vmem:[#allocation10 + $0x18] sm:$0xf]
          %v1855 = vld [vmem:[#allocation10 + $0x1c] sm:$0xf]
          %v1856 = vld [vmem:[#allocation10 + $0x20] sm:$0xf]
          %v1857 = vld [vmem:[#allocation10 + $0x24] sm:$0xf]
          %v1858 = vld [vmem:[#allocation10 + $0x28] sm:$0xf]
          %v1859 = vld [vmem:[#allocation10 + $0x2c] sm:$0xf]
          %v1860 = vld [vmem:[#allocation10 + $0x30] sm:$0xf]
          %v1861 = vld [vmem:[#allocation10 + $0x34] sm:$0xf]
          %v1862 = vld [vmem:[#allocation10 + $0x38] sm:$0xf]
          %v1863 = vld [vmem:[#allocation10 + $0x3c] sm:$0xf]
          %v1864 = vld [vmem:[%s10] sm:$0x1]
          %v1866 = vlaneseq
          %v1867 = vshrl.u32 %v1866, 7
          %v1868 = vsub.s32 0, %v1867
          %v1869 = vrot.slane %v1864, %v1868
          %v1887 = vunpack.c.l.b16 %v1848
          %v1888 = vunpack.c.l.b16 %v1849
          %v1889 = vunpack.c.l.b16 %v1850
          %v1890 = vunpack.c.l.b16 %v1851
          %v1891 = vunpack.c.l.b16 %v1852
          %v1892 = vunpack.c.l.b16 %v1853
          %v1893 = vunpack.c.l.b16 %v1854
          %v1894 = vunpack.c.l.b16 %v1855
          %v1895 = vunpack.c.l.b16 %v1856
          %v1896 = vunpack.c.l.b16 %v1857
          %v1897 = vunpack.c.l.b16 %v1858
          %v1898 = vunpack.c.l.b16 %v1859
          %v1899 = vunpack.c.l.b16 %v1860
          %v1900 = vunpack.c.l.b16 %v1861
          %v1901 = vunpack.c.l.b16 %v1862
          %v1902 = vunpack.c.l.b16 %v1863
          %v1903 = vpack.c.b16 %v1888, %v1887
          %v1904 = vpack.c.b16 %v1890, %v1889
          %v1905 = vpack.c.b16 %v1892, %v1891
          %v1906 = vpack.c.b16 %v1894, %v1893
          %v1907 = vpack.c.b16 %v1896, %v1895
          %v1908 = vpack.c.b16 %v1898, %v1897
          %v1909 = vpack.c.b16 %v1900, %v1899
          %v1910 = vpack.c.b16 %v1902, %v1901
          %1919 = vmatprep.subr.bf16.mxu0 0
          %1920 = vmatpush1.bf16.msra.mxu0 %v1910
          %1921 = vmatprep.subr.bf16.mxu0 0
          %1922 = vmatpush1.bf16.msra.mxu0 %v1909
          %1923 = vmatprep.subr.bf16.mxu0 0
          %1924 = vmatpush1.bf16.msra.mxu0 %v1908
          %1925 = vmatprep.subr.bf16.mxu0 0
          %1926 = vmatpush1.bf16.msra.mxu0 %v1907
          %1927 = vmatprep.subr.bf16.mxu0 0
          %1928 = vmatpush1.bf16.msra.mxu0 %v1906
          %1929 = vmatprep.subr.bf16.mxu0 0
          %1930 = vmatpush1.bf16.msra.mxu0 %v1905
          %1931 = vmatprep.subr.bf16.mxu0 0
          %1932 = vmatpush1.bf16.msra.mxu0 %v1904
          %1933 = vmatprep.subr.bf16.mxu0 0
          %1934 = vmatpush1.bf16.msra.mxu0 %v1903
          %1935 = vmatprep.subr.bf16.mxu0 0
          %1936 = vmatpush2.bf16.msra.mxu0 0
          %1937 = vmatprep.subr.bf16.mxu0 0
          %1938 = vmatpush2.bf16.msra.mxu0 0
          %1939 = vmatprep.subr.bf16.mxu0 0
          %1940 = vmatpush2.bf16.msra.mxu0 0
          %1941 = vmatprep.subr.bf16.mxu0 0
          %1942 = vmatpush2.bf16.msra.mxu0 0
          %1943 = vmatprep.subr.bf16.mxu0 0
          %1944 = vmatpush2.bf16.msra.mxu0 0
          %1945 = vmatprep.subr.bf16.mxu0 0
          %1946 = vmatpush2.bf16.msra.mxu0 0
          %1947 = vmatprep.subr.bf16.mxu0 0
          %1948 = vmatpush2.bf16.msra.mxu0 0
          %1949 = vmatprep.subr.bf16.mxu0 0
          %1950 = vmatpush2.bf16.msra.mxu0 0
          %1951 = vmatprep.mubr.bf16.mxu0 0
          %1952 = vmatmul.mubr.bf16.gmra.mxu0 %v1846
          %v1953 = vpop.f32.mrf.mxu0
          %v1954 = vadd.f32 %v1869, %v1953
          %v1955 = vpop.f32.mrf.mxu0
          %v1956 = vpop.f32.mrf.mxu0
          %v1957 = vadd.f32 %v1869, %v1956
          %v1958 = vpop.f32.mrf.mxu0
          %1959 = vmatprep.mubr.bf16.mxu0 0
          %1960 = vmatmul.mubr.bf16.gmra.mxu0 %v1847
          %v1961 = vpop.f32.mrf.mxu0
          %v1962 = vadd.f32 %v1869, %v1961
          %v1963 = vpop.f32.mrf.mxu0
          %v1964 = vpop.f32.mrf.mxu0
          %v1965 = vadd.f32 %v1869, %v1964
          %v1966 = vpop.f32.mrf.mxu0
          %1967 = vdwg.mxu0
          %1968 = vst [vmem:[%s504] sm:$0xff] %v1954
          %1969 = vst [vmem:[%s504 + $0x8] sm:$0xff] %v1957
          %1970 = vst [vmem:[%s504 + $0x10] sm:$0xff] %v1962
          %1971 = vst [vmem:[%s504 + $0x18] sm:$0xff] %v1965
        $region92: #{tpu_custom_call.1} parent=63 // pred_fallthru
          _
        %s1972 = sand.u32 %s307, 1
        %s1973 = scalar_lea.sflag [#allocation6], %s1972
        %s1974 = sand.u32 %s307, 1
        %s1975 = smul.addr %s1974, 32
        %s1976 = scalar_lea.vmem [#allocation12], %s1975
        // Predicated region
        $region93: #{tpu_custom_call.1} parent=63 // pred_check
          %p1977 = pneg %p317
        $region94: #{tpu_custom_call.1} parent=63 // pred_check_branch
          %1979 = sbr.rel (%p1977) target = $region96
        $region95: #{tpu_custom_call.1} parent=63 // pred_region
          %s1980 = smul.u32 %s35, %s34
          %s1981 = smul.u32 4, %s1980
          %s1983 = ssub.s32 512, 512
          %1984 = vsyncadd %s1973, %s1983
          %s1985 = smul.addr %s33, 8
          %s1986 = sadd.s32 %s1981, %s1985
          %s1987 = smul.addr %s1986, 128
          %s1988 = scalar_lea.hbm %s11, %s1987
          %s1989 = sshll.u32 %s1976, 4
          %s1990 = int_to_ptr.vmem [resolvable:$true] %s1989
          %1995 = dma.vmem_to_hbm [thread:$0]  %s1990, 512, %s1988, %s1973, 128, 128, 8
        $region96: #{tpu_custom_call.1} parent=63 // pred_fallthru
          _
      $region64: #{tpu_custom_call.1} parent=5 // pred_fallthru
        _
      %p1996 = scmp.le.s32.totalorder 2, %s23
      // Predicated region
      $region97: #{tpu_custom_call.1} parent=5 // pred_check
        %p1997 = pneg %p1996
      $region98: #{tpu_custom_call.1} parent=5 // pred_check_branch
        %1999 = sbr.rel (%p1997) target = $region100
      $region99: #{tpu_custom_call.1} parent=5 // pred_region
        %s2000 = ssub.s32 %s23, 2
        // Predicated region
        $region101: #{tpu_custom_call.1} parent=99 // pred_check
          %p2001 = pneg %p323
        $region102: #{tpu_custom_call.1} parent=99 // pred_check_branch
          %2003 = sbr.rel (%p2001) target = $region104
        $region103: #{tpu_custom_call.1} parent=99 // pred_region
          %s2004 = sand.u32 %s308, 1
          %s2005 = scalar_lea.sflag [#allocation6], %s2004
          %s2006 = sand.u32 %s308, 1
          %s2007 = smul.addr %s2006, 32
          %s2008 = scalar_lea.vmem [#allocation12], %s2007
          %2009 = dma.done %s2005, 512
        $region104: #{tpu_custom_call.1} parent=99 // pred_fallthru
          _
      $region100: #{tpu_custom_call.1} parent=5 // pred_fallthru
        _
    $region6: #{tpu_custom_call.1} parent=1 // loop_footer
      %s27 = sadd.s32 1, %s23
    $region7: #{tpu_custom_call.1} parent=1 // loop_footer_branch
      %22 = sbr.rel target = $region3
    $region8: #{tpu_custom_call.1} parent=1 // loop_exit
      _
    %2010 = vsyncpa [#allocation5], 1
    %s2011 = scalar_lea.sflag [#allocation5], 1
    %2012 = vsyncpa %s2011, 1
    %2013 = vsyncpa [#allocation8], 1
    %2014 = vsyncpa [#allocation11], 1
    %2015 = vsyncpa [#allocation6], 1
    %s2016 = scalar_lea.sflag [#allocation6], 1
    %2017 = vsyncpa %s2016, 1

</llo_original>
